<compile_context>
chip_gen: v6e
topology: v6e:2x2x1
jax: 0.10.0
libtpu: 0.0.40
codegen_flags: <defaults>
</compile_context>

<pallas_src>
import jax
import jax.numpy as jnp
from jax.experimental import pallas as pl
from jax.experimental.pallas import tpu as pltpu


# ----------------------------------------------------------------------------- helpers
def _round_up(x, m):
    return ((x + m - 1) // m) * m


def _pick_tile(total, candidates):
    for c in candidates:
        if total >= c and total % c == 0:
            return c
    return total  # small / odd sizes: single full-extent block


def _vmem_limit_bytes():
    # Generation-gated scoped-VMEM limit: ~3/4 of physical, capped at 96 MiB.
    try:
        cap = pltpu.get_tpu_info().vmem_capacity_bytes
    except Exception:
        cap = 64 * 1024 * 1024  # conservative (v7x per-TC capacity)
    return max(32 * 1024 * 1024, min(int(0.75 * cap), 96 * 1024 * 1024))


# ----------------------------------------------------------------------------- conv + BN + act
def _make_conv_kernel(k, wp, l_out, use_swish):
    """K*K accumulating MXU matmuls over lane-shifted taps of a flat-padded image."""

    def kernel(x_ref, w_ref, b_ref, o_ref):
        # x_ref: (1, Cin, L_in)      bf16, flat-padded image (channels x flat spatial)
        # w_ref: (K*K, TCO, Cin)     bf16, BN-scale-folded per-tap weights
        # b_ref: (TCO, 1)            f32 folded BN bias
        # o_ref: (1, TCO, L_out)     bf16/f32, channels in sublanes, flat spatial in lanes
        acc = None
        for kh in range(k):
            for kw in range(k):
                tap = kh * k + kw
                off = kh * wp + kw                       # static lane offset of this tap
                xs = x_ref[0, :, off:off + l_out]        # (Cin, L_out) VMEM-local shift
                part = jnp.dot(w_ref[tap], xs, preferred_element_type=jnp.float32)
                acc = part if acc is None else acc + part
        y = acc + b_ref[...]                             # folded BN bias, f32
        if use_swish:
            y = y * jax.nn.sigmoid(y)                    # Swish epilogue (EUP sigmoid)
        o_ref[0] = y.astype(o_ref.dtype)                 # lane-dense, unmasked store

    return kernel


def conv_bn_act(x, w, *, kernel_size, bn=None, conv_bias=None, act="swish",
                out_dtype=jnp.bfloat16, eps=1e-5):
    """ConvBnAct2d forward: KxK conv (stride 1, 'same'), optional BN(eval), optional Swish."""
    n, cin, h, wd = x.shape
    cout = w.shape[0]
    k = int(kernel_size)
    pad = (k - 1) // 2
    hp, wp = h + 2 * pad, wd + 2 * pad
    n_taps = k * k

    # --- BN folding (eval mode): scale -> weights, bias stays a per-channel f32 vector.
    if bn is not None:
        gamma, beta, mean, var = bn
        scale = gamma / jnp.sqrt(var + eps)
        bias = beta - mean * scale
        if conv_bias is not None:
            bias = bias + conv_bias * scale
        w_fold = w * scale[:, None, None, None]
    else:
        w_fold = w
        bias = conv_bias if conv_bias is not None else jnp.zeros((cout,), jnp.float32)

    w_taps = jnp.transpose(w_fold, (2, 3, 0, 1)).reshape(n_taps, cout, cin).astype(jnp.bfloat16)
    bias2d = bias.reshape(cout, 1).astype(jnp.float32)

    # --- Flat-padded input layout: no im2col duplication, only the 'same' zero-pad
    #     (~1.1x) plus a small tail so every tap slice stays in bounds.  The output
    #     is computed over (H, Wp) flat positions (garbage columns discarded below),
    #     lane-padded to a multiple of 128 for unmasked stores.
    l_out = _round_up(h * wp, 128)
    l_in = _round_up(l_out + 2 * pad * (wp + 1), 128)
    xp = jnp.pad(x, ((0, 0), (0, 0), (pad, pad), (pad, pad)))
    xf = xp.reshape(n, cin, hp * wp)
    xf = jnp.pad(xf, ((0, 0), (0, 0), (0, l_in - hp * wp))).astype(jnp.bfloat16)

    # --- Cout tiling: keep the whole folded weight matrix VMEM-resident when small.
    w_bytes = n_taps * cout * cin * 2
    tco = cout if w_bytes <= (4 << 20) else _pick_tile(cout, (256, 128))
    n_co = cout // tco
    grid = (n, n_co)  # c innermost -> the x block (index indep. of c) is fetched once per image

    use_swish = (act == "swish")
    out_isize = jnp.dtype(out_dtype).itemsize
    cost = pl.CostEstimate(
        flops=int(2 * n * cout * cin * n_taps * l_out),
        transcendentals=int(n * cout * l_out) if use_swish else 0,
        bytes_accessed=int(
            n * cin * l_in * 2                                   # input (once per image)
            + (1 if n_co == 1 else n) * n_taps * cout * cin * 2  # weights (re-streamed iff tiled)
            + (1 if n_co == 1 else n) * cout * 4                 # bias
            + n * cout * l_out * out_isize),                     # output writeback
    )

    out_flat = pl.pallas_call(
        _make_conv_kernel(k, wp, l_out, use_swish),
        out_shape=jax.ShapeDtypeStruct((n, cout, l_out), out_dtype),
        grid=grid,
        in_specs=[
            pl.BlockSpec((1, cin, l_in), lambda ni, ci: (ni, 0, 0)),
            pl.BlockSpec((n_taps, tco, cin), lambda ni, ci: (0, ci, 0)),
            pl.BlockSpec((tco, 1), lambda ni, ci: (ci, 0)),
        ],
        out_specs=pl.BlockSpec((1, tco, l_out), lambda ni, ci: (ni, ci, 0)),
        compiler_params=pltpu.CompilerParams(
            dimension_semantics=("parallel", "parallel"),
            vmem_limit_bytes=_vmem_limit_bytes(),
        ),
        cost_estimate=cost,
    )(xf, w_taps, bias2d)

    # Drop the pad columns / lane padding: pure strided slice + reshape (no transpose).
    out = out_flat[:, :, :h * wp].reshape(n, cout, h, wp)[:, :, :, :wd]
    return out


# ----------------------------------------------------------------------------- attn combine
def _make_combine_kernel(k):
    def kernel(w_ref, *refs):
        # w_ref: (k,) f32 normalized edge weights in SMEM; refs = k node tiles + output tile.
        node_refs = refs[:k]
        o_ref = refs[k]
        acc = node_refs[0][...].astype(jnp.float32) * w_ref[0]
        for i in range(1, k):
            acc = acc + node_refs[i][...].astype(jnp.float32) * w_ref[i]
        o_ref[...] = acc.astype(o_ref.dtype)

    return kernel


def giraffe_combine_attn(nodes, edge_weights, out_dtype=jnp.bfloat16):
    """GiraffeCombine weight_method='attn': sum_k softmax(edge_weights)[k] * node_k."""
    k = len(nodes)
    n, c, h, wd = nodes[0].shape
    rows, lanes = n * c, h * wd
    flat = [jnp.reshape(nd, (rows, lanes)) for nd in nodes]
    norm_w = jax.nn.softmax(edge_weights.astype(jnp.float32))

    tr = _pick_tile(rows, (512, 256, 128, 64, 32, 16, 8))
    grid = (rows // tr,)

    out = pl.pallas_call(
        _make_combine_kernel(k),
        out_shape=jax.ShapeDtypeStruct((rows, lanes), out_dtype),
        grid=grid,
        in_specs=[pl.BlockSpec(memory_space=pltpu.MemorySpace.SMEM)]
                 + [pl.BlockSpec((tr, lanes), lambda i: (i, 0)) for _ in range(k)],
        out_specs=pl.BlockSpec((tr, lanes), lambda i: (i, 0)),
        compiler_params=pltpu.CompilerParams(
            dimension_semantics=("parallel",),
            vmem_limit_bytes=_vmem_limit_bytes(),
        ),
    )(norm_w, *flat)
    return out.reshape(n, c, h, wd)


# ----------------------------------------------------------------------------- demo / checks
if __name__ == "__main__":
    eps = 1e-5
    key = jax.random.PRNGKey(0)
    ks = jax.random.split(key, 20)

    N, H, W = 2, 16, 16
    C0, C1, FPN_C = 4, 6, 8

    def conv_ref(xq, wq, ksz):
        p = (ksz - 1) // 2
        return jax.lax.conv_general_dilated(
            xq, wq, window_strides=(1, 1), padding=((p, p), (p, p)),
            dimension_numbers=("NCHW", "OIHW", "NCHW"))

    # --- Check 1: generic ConvBnAct2d default (conv3x3 'same' + BN(eval) + Swish) ----
    x0 = jax.random.normal(ks[0], (N, C0, H, W), jnp.float32)
    w3 = jax.random.normal(ks[1], (FPN_C, C0, 3, 3), jnp.float32) * 0.1
    g3 = 1.0 + 0.1 * jax.random.normal(ks[2], (FPN_C,), jnp.float32)
    b3 = 0.1 * jax.random.normal(ks[3], (FPN_C,), jnp.float32)
    m3 = 0.1 * jax.random.normal(ks[4], (FPN_C,), jnp.float32)
    v3 = jnp.abs(jax.random.normal(ks[5], (FPN_C,), jnp.float32)) + 0.5

    y3 = jax.block_until_ready(
        conv_bn_act(x0, w3, kernel_size=3, bn=(g3, b3, m3, v3), act="swish"))
    assert y3.shape == (N, FPN_C, H, W)

    s3 = g3 / jnp.sqrt(v3 + eps)
    bias3 = b3 - m3 * s3
    xq0 = x0.astype(jnp.bfloat16).astype(jnp.float32)
    wq3 = (w3 * s3[:, None, None, None]).astype(jnp.bfloat16).astype(jnp.float32)
    ref3 = conv_ref(xq0, wq3, 3) + bias3.reshape(1, -1, 1, 1)
    ref3 = ref3 * jax.nn.sigmoid(ref3)
    ref3_q = ref3.astype(jnp.bfloat16).astype(jnp.float32)   # same output quantization
    y3f = y3.astype(jnp.float32)
    assert jnp.allclose(y3f, ref3_q, atol=1e-2, rtol=1e-2), \
        float(jnp.max(jnp.abs(y3f - ref3_q)))

    ref3_f = conv_ref(x0, w3, 3) * s3.reshape(1, -1, 1, 1) + bias3.reshape(1, -1, 1, 1)
    ref3_f = ref3_f * jax.nn.sigmoid(ref3_f)                  # pure-f32 reference
    assert jnp.allclose(y3f, ref3_f, atol=8e-2, rtol=8e-2), \
        float(jnp.max(jnp.abs(y3f - ref3_f)))

    # --- Check 2: GiraffeCombine forward, weight_method='attn', two same-reduction inputs.
    #     Each ResampleFeatureMap branch (reduction_ratio=1, apply_resample_bn=True) is a
    #     1x1 ConvBnAct2d (BN, no act) mapping C_in -> fpn_channels.
    x1 = jax.random.normal(ks[6], (N, C1, H, W), jnp.float32)
    w0 = jax.random.normal(ks[7], (FPN_C, C0, 1, 1), jnp.float32) * 0.2
    w1 = jax.random.normal(ks[8], (FPN_C, C1, 1, 1), jnp.float32) * 0.2
    g0 = 1.0 + 0.1 * jax.random.normal(ks[9], (FPN_C,), jnp.float32)
    b0 = 0.1 * jax.random.normal(ks[10], (FPN_C,), jnp.float32)
    m0 = 0.1 * jax.random.normal(ks[11], (FPN_C,), jnp.float32)
    v0 = jnp.abs(jax.random.normal(ks[12], (FPN_C,), jnp.float32)) + 0.5
    g1 = 1.0 + 0.1 * jax.random.normal(ks[13], (FPN_C,), jnp.float32)
    b1 = 0.1 * jax.random.normal(ks[14], (FPN_C,), jnp.float32)
    m1 = 0.1 * jax.random.normal(ks[15], (FPN_C,), jnp.float32)
    v1 = jnp.abs(jax.random.normal(ks[16], (FPN_C,), jnp.float32)) + 0.5
    edge_w = jnp.ones((2,), jnp.float32) + 0.3 * jax.random.normal(ks[17], (2,), jnp.float32)

    node0 = conv_bn_act(x0, w0, kernel_size=1, bn=(g0, b0, m0, v0), act=None)
    node1 = conv_bn_act(x1, w1, kernel_size=1, bn=(g1, b1, m1, v1), act=None)
    out = jax.block_until_ready(giraffe_combine_attn([node0, node1], edge_w))
    assert out.shape == (N, FPN_C, H, W)

    s0 = g0 / jnp.sqrt(v0 + eps); bb0 = b0 - m0 * s0
    s1 = g1 / jnp.sqrt(v1 + eps); bb1 = b1 - m1 * s1
    xq1 = x1.astype(jnp.bfloat16).astype(jnp.float32)
    wq0 = (w0 * s0[:, None, None, None]).astype(jnp.bfloat16).astype(jnp.float32)
    wq1 = (w1 * s1[:, None, None, None]).astype(jnp.bfloat16).astype(jnp.float32)
    n0_ref = conv_ref(xq0, wq0, 1) + bb0.reshape(1, -1, 1, 1)
    n1_ref = conv_ref(xq1, wq1, 1) + bb1.reshape(1, -1, 1, 1)
    nw = jax.nn.softmax(edge_w)
    ref_c = nw[0] * n0_ref + nw[1] * n1_ref
    outf = out.astype(jnp.float32)
    assert jnp.allclose(outf, ref_c, atol=3e-2, rtol=3e-2), \
        float(jnp.max(jnp.abs(outf - ref_c)))

    print("KERNEL_OK")
</pallas_src>

<mosaic_0001>
module attributes {stable_mosaic.version = 11 : i64} {
  func.func @kernel(%arg0: i32, %arg1: i32, %arg2: memref<1x4x512xbf16, #tpu.memory_space<vmem>>, %arg3: memref<9x8x4xbf16, #tpu.memory_space<vmem>>, %arg4: memref<8x1xf32, #tpu.memory_space<vmem>>, %arg5: memref<1x8x384xbf16, #tpu.memory_space<vmem>>) attributes {dimension_semantics = [#tpu.dimension_semantics<parallel>, #tpu.dimension_semantics<parallel>], iteration_bounds = array<i64: 2, 1>, scalar_prefetch = 0 : i64, scratch_operands = 0 : i64, tpu.core_type = #tpu.core_type<tc>, window_params = [{transform_indices = @transform_0, window_bounds = array<i64: 1, 4, 512>}, {transform_indices = @transform_1, window_bounds = array<i64: 9, 8, 4>}, {transform_indices = @transform_2, window_bounds = array<i64: 8, 1>}, {transform_indices = @transform_3, window_bounds = array<i64: 1, 8, 384>}]} {
    %c0 = arith.constant 0 : index
    %c0_0 = arith.constant 0 : index
    %c0_1 = arith.constant 0 : index
    %0 = vector.load %arg2[%c0, %c0_0, %c0_1] : memref<1x4x512xbf16, #tpu.memory_space<vmem>>, vector<1x4x384xbf16>
    %1 = vector.shape_cast %0 : vector<1x4x384xbf16> to vector<4x384xbf16>
    %c0_2 = arith.constant 0 : index
    %c0_3 = arith.constant 0 : index
    %c0_4 = arith.constant 0 : index
    %2 = vector.load %arg3[%c0_2, %c0_3, %c0_4] : memref<9x8x4xbf16, #tpu.memory_space<vmem>>, vector<1x8x4xbf16>
    %3 = vector.shape_cast %2 : vector<1x8x4xbf16> to vector<8x4xbf16>
    %cst = arith.constant dense<0.000000e+00> : vector<8x384xf32>
    %4 = tpu.matmul %3, %1, %cst {dimension_numbers = #tpu.dot_dimension_numbers<[1], [0], [0], [1], [0, 0, 1, 1], [], []>} : vector<8x4xbf16>, vector<4x384xbf16>, vector<8x384xf32> -> vector<8x384xf32>
    %c0_5 = arith.constant 0 : index
    %c0_6 = arith.constant 0 : index
    %c1 = arith.constant 1 : index
    %5 = vector.load %arg2[%c0_5, %c0_6, %c1] : memref<1x4x512xbf16, #tpu.memory_space<vmem>>, vector<1x4x384xbf16>
    %6 = vector.shape_cast %5 : vector<1x4x384xbf16> to vector<4x384xbf16>
    %c1_7 = arith.constant 1 : index
    %c0_8 = arith.constant 0 : index
    %c0_9 = arith.constant 0 : index
    %7 = vector.load %arg3[%c1_7, %c0_8, %c0_9] : memref<9x8x4xbf16, #tpu.memory_space<vmem>>, vector<1x8x4xbf16>
    %8 = vector.shape_cast %7 : vector<1x8x4xbf16> to vector<8x4xbf16>
    %cst_10 = arith.constant dense<0.000000e+00> : vector<8x384xf32>
    %9 = tpu.matmul %8, %6, %cst_10 {dimension_numbers = #tpu.dot_dimension_numbers<[1], [0], [0], [1], [0, 0, 1, 1], [], []>} : vector<8x4xbf16>, vector<4x384xbf16>, vector<8x384xf32> -> vector<8x384xf32>
    %10 = arith.addf %4, %9 : vector<8x384xf32>
    %c0_11 = arith.constant 0 : index
    %c0_12 = arith.constant 0 : index
    %c2 = arith.constant 2 : index
    %11 = vector.load %arg2[%c0_11, %c0_12, %c2] : memref<1x4x512xbf16, #tpu.memory_space<vmem>>, vector<1x4x384xbf16>
    %12 = vector.shape_cast %11 : vector<1x4x384xbf16> to vector<4x384xbf16>
    %c2_13 = arith.constant 2 : index
    %c0_14 = arith.constant 0 : index
    %c0_15 = arith.constant 0 : index
    %13 = vector.load %arg3[%c2_13, %c0_14, %c0_15] : memref<9x8x4xbf16, #tpu.memory_space<vmem>>, vector<1x8x4xbf16>
    %14 = vector.shape_cast %13 : vector<1x8x4xbf16> to vector<8x4xbf16>
    %cst_16 = arith.constant dense<0.000000e+00> : vector<8x384xf32>
    %15 = tpu.matmul %14, %12, %cst_16 {dimension_numbers = #tpu.dot_dimension_numbers<[1], [0], [0], [1], [0, 0, 1, 1], [], []>} : vector<8x4xbf16>, vector<4x384xbf16>, vector<8x384xf32> -> vector<8x384xf32>
    %16 = arith.addf %10, %15 : vector<8x384xf32>
    %c0_17 = arith.constant 0 : index
    %c0_18 = arith.constant 0 : index
    %c18 = arith.constant 18 : index
    %17 = vector.load %arg2[%c0_17, %c0_18, %c18] : memref<1x4x512xbf16, #tpu.memory_space<vmem>>, vector<1x4x384xbf16>
    %18 = vector.shape_cast %17 : vector<1x4x384xbf16> to vector<4x384xbf16>
    %c3 = arith.constant 3 : index
    %c0_19 = arith.constant 0 : index
    %c0_20 = arith.constant 0 : index
    %19 = vector.load %arg3[%c3, %c0_19, %c0_20] : memref<9x8x4xbf16, #tpu.memory_space<vmem>>, vector<1x8x4xbf16>
    %20 = vector.shape_cast %19 : vector<1x8x4xbf16> to vector<8x4xbf16>
    %cst_21 = arith.constant dense<0.000000e+00> : vector<8x384xf32>
    %21 = tpu.matmul %20, %18, %cst_21 {dimension_numbers = #tpu.dot_dimension_numbers<[1], [0], [0], [1], [0, 0, 1, 1], [], []>} : vector<8x4xbf16>, vector<4x384xbf16>, vector<8x384xf32> -> vector<8x384xf32>
    %22 = arith.addf %16, %21 : vector<8x384xf32>
    %c0_22 = arith.constant 0 : index
    %c0_23 = arith.constant 0 : index
    %c19 = arith.constant 19 : index
    %23 = vector.load %arg2[%c0_22, %c0_23, %c19] : memref<1x4x512xbf16, #tpu.memory_space<vmem>>, vector<1x4x384xbf16>
    %24 = vector.shape_cast %23 : vector<1x4x384xbf16> to vector<4x384xbf16>
    %c4 = arith.constant 4 : index
    %c0_24 = arith.constant 0 : index
    %c0_25 = arith.constant 0 : index
    %25 = vector.load %arg3[%c4, %c0_24, %c0_25] : memref<9x8x4xbf16, #tpu.memory_space<vmem>>, vector<1x8x4xbf16>
    %26 = vector.shape_cast %25 : vector<1x8x4xbf16> to vector<8x4xbf16>
    %cst_26 = arith.constant dense<0.000000e+00> : vector<8x384xf32>
    %27 = tpu.matmul %26, %24, %cst_26 {dimension_numbers = #tpu.dot_dimension_numbers<[1], [0], [0], [1], [0, 0, 1, 1], [], []>} : vector<8x4xbf16>, vector<4x384xbf16>, vector<8x384xf32> -> vector<8x384xf32>
    %28 = arith.addf %22, %27 : vector<8x384xf32>
    %c0_27 = arith.constant 0 : index
    %c0_28 = arith.constant 0 : index
    %c20 = arith.constant 20 : index
    %29 = vector.load %arg2[%c0_27, %c0_28, %c20] : memref<1x4x512xbf16, #tpu.memory_space<vmem>>, vector<1x4x384xbf16>
    %30 = vector.shape_cast %29 : vector<1x4x384xbf16> to vector<4x384xbf16>
    %c5 = arith.constant 5 : index
    %c0_29 = arith.constant 0 : index
    %c0_30 = arith.constant 0 : index
    %31 = vector.load %arg3[%c5, %c0_29, %c0_30] : memref<9x8x4xbf16, #tpu.memory_space<vmem>>, vector<1x8x4xbf16>
    %32 = vector.shape_cast %31 : vector<1x8x4xbf16> to vector<8x4xbf16>
    %cst_31 = arith.constant dense<0.000000e+00> : vector<8x384xf32>
    %33 = tpu.matmul %32, %30, %cst_31 {dimension_numbers = #tpu.dot_dimension_numbers<[1], [0], [0], [1], [0, 0, 1, 1], [], []>} : vector<8x4xbf16>, vector<4x384xbf16>, vector<8x384xf32> -> vector<8x384xf32>
    %34 = arith.addf %28, %33 : vector<8x384xf32>
    %c0_32 = arith.constant 0 : index
    %c0_33 = arith.constant 0 : index
    %c36 = arith.constant 36 : index
    %35 = vector.load %arg2[%c0_32, %c0_33, %c36] : memref<1x4x512xbf16, #tpu.memory_space<vmem>>, vector<1x4x384xbf16>
    %36 = vector.shape_cast %35 : vector<1x4x384xbf16> to vector<4x384xbf16>
    %c6 = arith.constant 6 : index
    %c0_34 = arith.constant 0 : index
    %c0_35 = arith.constant 0 : index
    %37 = vector.load %arg3[%c6, %c0_34, %c0_35] : memref<9x8x4xbf16, #tpu.memory_space<vmem>>, vector<1x8x4xbf16>
    %38 = vector.shape_cast %37 : vector<1x8x4xbf16> to vector<8x4xbf16>
    %cst_36 = arith.constant dense<0.000000e+00> : vector<8x384xf32>
    %39 = tpu.matmul %38, %36, %cst_36 {dimension_numbers = #tpu.dot_dimension_numbers<[1], [0], [0], [1], [0, 0, 1, 1], [], []>} : vector<8x4xbf16>, vector<4x384xbf16>, vector<8x384xf32> -> vector<8x384xf32>
    %40 = arith.addf %34, %39 : vector<8x384xf32>
    %c0_37 = arith.constant 0 : index
    %c0_38 = arith.constant 0 : index
    %c37 = arith.constant 37 : index
    %41 = vector.load %arg2[%c0_37, %c0_38, %c37] : memref<1x4x512xbf16, #tpu.memory_space<vmem>>, vector<1x4x384xbf16>
    %42 = vector.shape_cast %41 : vector<1x4x384xbf16> to vector<4x384xbf16>
    %c7 = arith.constant 7 : index
    %c0_39 = arith.constant 0 : index
    %c0_40 = arith.constant 0 : index
    %43 = vector.load %arg3[%c7, %c0_39, %c0_40] : memref<9x8x4xbf16, #tpu.memory_space<vmem>>, vector<1x8x4xbf16>
    %44 = vector.shape_cast %43 : vector<1x8x4xbf16> to vector<8x4xbf16>
    %cst_41 = arith.constant dense<0.000000e+00> : vector<8x384xf32>
    %45 = tpu.matmul %44, %42, %cst_41 {dimension_numbers = #tpu.dot_dimension_numbers<[1], [0], [0], [1], [0, 0, 1, 1], [], []>} : vector<8x4xbf16>, vector<4x384xbf16>, vector<8x384xf32> -> vector<8x384xf32>
    %46 = arith.addf %40, %45 : vector<8x384xf32>
    %c0_42 = arith.constant 0 : index
    %c0_43 = arith.constant 0 : index
    %c38 = arith.constant 38 : index
    %47 = vector.load %arg2[%c0_42, %c0_43, %c38] : memref<1x4x512xbf16, #tpu.memory_space<vmem>>, vector<1x4x384xbf16>
    %48 = vector.shape_cast %47 : vector<1x4x384xbf16> to vector<4x384xbf16>
    %c8 = arith.constant 8 : index
    %c0_44 = arith.constant 0 : index
    %c0_45 = arith.constant 0 : index
    %49 = vector.load %arg3[%c8, %c0_44, %c0_45] : memref<9x8x4xbf16, #tpu.memory_space<vmem>>, vector<1x8x4xbf16>
    %50 = vector.shape_cast %49 : vector<1x8x4xbf16> to vector<8x4xbf16>
    %cst_46 = arith.constant dense<0.000000e+00> : vector<8x384xf32>
    %51 = tpu.matmul %50, %48, %cst_46 {dimension_numbers = #tpu.dot_dimension_numbers<[1], [0], [0], [1], [0, 0, 1, 1], [], []>} : vector<8x4xbf16>, vector<4x384xbf16>, vector<8x384xf32> -> vector<8x384xf32>
    %52 = arith.addf %46, %51 : vector<8x384xf32>
    %c0_47 = arith.constant 0 : index
    %c0_48 = arith.constant 0 : index
    %53 = vector.load %arg4[%c0_47, %c0_48] : memref<8x1xf32, #tpu.memory_space<vmem>>, vector<8x1xf32>
    %54 = vector.broadcast %53 : vector<8x1xf32> to vector<8x384xf32>
    %55 = arith.addf %52, %54 : vector<8x384xf32>
    %56 = arith.negf %55 : vector<8x384xf32>
    %57 = math.exp %56 : vector<8x384xf32>
    %cst_49 = arith.constant 1.000000e+00 : f32
    %58 = vector.broadcast %cst_49 : f32 to vector<8x384xf32>
    %59 = arith.addf %58, %57 : vector<8x384xf32>
    %60 = arith.divf %58, %59 : vector<8x384xf32>
    %61 = arith.mulf %55, %60 : vector<8x384xf32>
    %62 = arith.truncf %61 : vector<8x384xf32> to vector<8x384xbf16>
    %c0_50 = arith.constant 0 : index
    %c0_51 = arith.constant 0 : index
    %c0_52 = arith.constant 0 : index
    %63 = vector.load %arg5[%c0_50, %c0_51, %c0_52] : memref<1x8x384xbf16, #tpu.memory_space<vmem>>, vector<1x8x384xbf16>
    %64 = vector.shape_cast %63 : vector<1x8x384xbf16> to vector<8x384xbf16>
    %65 = vector.shape_cast %62 : vector<8x384xbf16> to vector<1x8x384xbf16>
    tpu.vector_store %arg5[%c0_50, %c0_51, %c0_52], %65 {strides = array<i32>} : memref<1x8x384xbf16, #tpu.memory_space<vmem>>, vector<1x8x384xbf16>,
    return
  }
  func.func @transform_0(%arg0: i32, %arg1: i32) -> (i32, i32, i32) {
    %c0_i32 = arith.constant 0 : i32
    %c0_i32_0 = arith.constant 0 : i32
    %c0_i32_1 = arith.constant 0 : i32
    return %arg0, %c0_i32, %c0_i32_0 : i32, i32, i32
  }
  func.func @transform_1(%arg0: i32, %arg1: i32) -> (i32, i32, i32) {
    %c0_i32 = arith.constant 0 : i32
    %c0_i32_0 = arith.constant 0 : i32
    %c0_i32_1 = arith.constant 0 : i32
    return %c0_i32, %arg1, %c0_i32_0 : i32, i32, i32
  }
  func.func @transform_2(%arg0: i32, %arg1: i32) -> (i32, i32) {
    %c0_i32 = arith.constant 0 : i32
    %c0_i32_0 = arith.constant 0 : i32
    return %arg1, %c0_i32 : i32, i32
  }
  func.func @transform_3(%arg0: i32, %arg1: i32) -> (i32, i32, i32) {
    %c0_i32 = arith.constant 0 : i32
    %c0_i32_0 = arith.constant 0 : i32
    return %arg0, %arg1, %c0_i32 : i32, i32, i32
  }
}

</mosaic_0001>

<llo_original>
// kernel: tpu_custom_call.1
$region0: #{tpu_custom_call.1}
  #allocation0 [shape = 'u32[]', space=smem, size = 0x4, offset = 0x4, fixed_abs, tag = 'smem constant byte address 0x4 - core index']
  #allocation1 [shape = 'u32[144,128]{1,0:T(1,128)}', space=vmem, size = 0x12000, scoped, tag = 'internal scratch']
  %s0 = inlined_call_operand.vmem [shape: bf16[2,4,512], index: 0, kind: input, shape index: {}]
  %s1 = inlined_call_operand.vmem [shape: bf16[9,8,4], index: 1, kind: input, shape index: {}]
  %s2 = inlined_call_operand.vmem [shape: f32[8,1], index: 2, kind: input, shape index: {}]
  %s3 = inlined_call_operand.hbm [shape: bf16[2,8,384], index: 3, kind: output, shape index: {}]
  %s4 = sld [smem:[#allocation0]]
  $region45: #{tpu_custom_call.1} parent=0
    _
  %s6 = ssub.s32 1, %s4
  %s7 = scalar_select 0, %s6, %s4
  $region1: #{tpu_custom_call.1} parent=0
    #allocation2 [shape = 'u8[12288]{0}', space=vmem, size = 0x3000, scoped, tag = 'output window, operand 0']
    #allocation3 [shape = 's32[2]{0}', space=sflag, size = 0x8, scoped, tag = 'scoped memory for tpu_custom_call.1']
    %8 = vsyncpa [#allocation3], 0
    %s9 = scalar_lea.sflag [#allocation3], 1
    %10 = vsyncpa %s9, 0
    loop: start=0, step=1, limit=4
    $region2: #{tpu_custom_call.1} parent=1 // loop_pre_header
      _
    $region3: #{tpu_custom_call.1} parent=1 // loop_header
      %s12 = sphi 0, %s16
      %p13 = scmp.ge.s32.totalorder %s12, 4
      %s19 = sphi 0, %s31
      %s20 = sphi 0, %s27
      %s21 = sphi 0, %s19
      %s22 = sphi 0, %s20
      %s23 = sphi 0, %s21
      %s24 = sphi 0, %s22
      %s34 = sphi 0, %s36
      %s37 = sphi 0, %s34
      %s38 = sphi 0, %s37
      %s54 = sphi 0, %s38
      %s60 = sphi 0, %s62
      %s63 = sphi 0, %s60
      %s64 = sphi 0, %s63
      %s80 = sphi 0, %s64
      %s86 = sphi 0, %s88
      %s89 = sphi 0, %s86
      %s90 = sphi 0, %s89
      %s106 = sphi 0, %s90
      %s114 = sphi 0, %s116
      %s117 = sphi 0, %s114
      %s118 = sphi 0, %s117
      %s134 = sphi 0, %s118
    $region4: #{tpu_custom_call.1} parent=1 // loop_header_branch
      %15 = sbr.rel (%p13) target = $region8
    $region5: #{tpu_custom_call.1} parent=1 // loop_body
      %s17 = ssub.s32 %s12, 1
      %s18 = ssub.s32 %s12, 2
      %s25 = sadd.s32 1, %s20
      %p26 = scmp.ge.s32.totalorder %s25, 1
      %s27 = scalar_select %p26, 0, %s25
      %s28 = sadd.s32 1, %s19
      %s29 = scalar_select %p26, %s28, %s19
      %p30 = scmp.ge.s32.totalorder %s29, 2
      %s31 = scalar_select %p30, 0, %s29
      %s32 = ssub.s32 %s19, %s31
      %p33 = scmp.eq.s32.totalorder %s32, 0
      %s35 = sadd.s32 %s34, 1
      %s36 = scalar_select %p33, %s34, %s35
      %p39 = pneg %p33
      %p40 = scmp.eq.s32.totalorder %s12, 1
      %p41 = por %p39, %p40
      %p42 = scmp.ne.s32.totalorder %s34, %s37
      %p43 = scmp.eq.s32.totalorder %s12, 0
      %p44 = por %p42, %p43
      %p45 = scmp.ne.s32.totalorder %s34, %s37
      %p46 = scmp.eq.s32.totalorder %s17, 1
      %p47 = por %p45, %p46
      %p48 = scmp.ne.s32.totalorder %s37, %s38
      %p49 = scmp.eq.s32.totalorder %s17, 0
      %p50 = por %p48, %p49
      %p51 = scmp.ne.s32.totalorder %s37, %s38
      %p52 = scmp.eq.s32.totalorder %s18, 1
      %p53 = por %p51, %p52
      %p55 = scmp.ne.s32.totalorder %s38, %s54
      %p56 = scmp.eq.s32.totalorder %s18, 0
      %p57 = por %p55, %p56
      %s58 = ssub.s32 %s20, %s27
      %p59 = scmp.eq.s32.totalorder %s58, 0
      %s61 = sadd.s32 %s60, 1
      %s62 = scalar_select %p59, %s60, %s61
      %p65 = pneg %p59
      %p66 = scmp.eq.s32.totalorder %s12, 1
      %p67 = por %p65, %p66
      %p68 = scmp.ne.s32.totalorder %s60, %s63
      %p69 = scmp.eq.s32.totalorder %s12, 0
      %p70 = por %p68, %p69
      %p71 = scmp.ne.s32.totalorder %s60, %s63
      %p72 = scmp.eq.s32.totalorder %s17, 1
      %p73 = por %p71, %p72
      %p74 = scmp.ne.s32.totalorder %s63, %s64
      %p75 = scmp.eq.s32.totalorder %s17, 0
      %p76 = por %p74, %p75
      %p77 = scmp.ne.s32.totalorder %s63, %s64
      %p78 = scmp.eq.s32.totalorder %s18, 1
      %p79 = por %p77, %p78
      %p81 = scmp.ne.s32.totalorder %s64, %s80
      %p82 = scmp.eq.s32.totalorder %s18, 0
      %p83 = por %p81, %p82
      %s84 = ssub.s32 %s20, %s27
      %p85 = scmp.eq.s32.totalorder %s84, 0
      %s87 = sadd.s32 %s86, 1
      %s88 = scalar_select %p85, %s86, %s87
      %p91 = pneg %p85
      %p92 = scmp.eq.s32.totalorder %s12, 1
      %p93 = por %p91, %p92
      %p94 = scmp.ne.s32.totalorder %s86, %s89
      %p95 = scmp.eq.s32.totalorder %s12, 0
      %p96 = por %p94, %p95
      %p97 = scmp.ne.s32.totalorder %s86, %s89
      %p98 = scmp.eq.s32.totalorder %s17, 1
      %p99 = por %p97, %p98
      %p100 = scmp.ne.s32.totalorder %s89, %s90
      %p101 = scmp.eq.s32.totalorder %s17, 0
      %p102 = por %p100, %p101
      %p103 = scmp.ne.s32.totalorder %s89, %s90
      %p104 = scmp.eq.s32.totalorder %s18, 1
      %p105 = por %p103, %p104
      %p107 = scmp.ne.s32.totalorder %s90, %s106
      %p108 = scmp.eq.s32.totalorder %s18, 0
      %p109 = por %p107, %p108
      %s110 = ssub.s32 %s19, %s31
      %s111 = ssub.s32 %s20, %s27
      %s112 = sor.u32 %s110, %s111
      %p113 = scmp.eq.s32.totalorder %s112, 0
      %s115 = sadd.s32 %s114, 1
      %s116 = scalar_select %p113, %s114, %s115
      %p119 = pneg %p113
      %p120 = scmp.eq.s32.totalorder %s12, 1
      %p121 = por %p119, %p120
      %p122 = scmp.ne.s32.totalorder %s114, %s117
      %p123 = scmp.eq.s32.totalorder %s12, 0
      %p124 = por %p122, %p123
      %p125 = scmp.ne.s32.totalorder %s114, %s117
      %p126 = scmp.eq.s32.totalorder %s17, 1
      %p127 = por %p125, %p126
      %p128 = scmp.ne.s32.totalorder %s117, %s118
      %p129 = scmp.eq.s32.totalorder %s17, 0
      %p130 = por %p128, %p129
      %p131 = scmp.ne.s32.totalorder %s117, %s118
      %p132 = scmp.eq.s32.totalorder %s18, 1
      %p133 = por %p131, %p132
      %p135 = scmp.ne.s32.totalorder %s118, %s134
      %p136 = scmp.eq.s32.totalorder %s18, 0
      %p137 = por %p135, %p136
      %p138 = scmp.le.s32.totalorder 1, %s12
      %p139 = scmp.lt.s32.totalorder %s12, 3
      %p140 = pnand %p138, %p139
      %p141 = pneg %p140
      // Predicated region
      $region9: #{tpu_custom_call.1} parent=5 // pred_check
        _
      $region10: #{tpu_custom_call.1} parent=5 // pred_check_branch
        %143 = sbr.rel (%p140) target = $region12
      $region11: #{tpu_custom_call.1} parent=5 // pred_region
        %s144 = ssub.s32 %s12, 1
        // Predicated region
        $region13: #{tpu_custom_call.1} parent=11 // pred_check
          %p145 = pneg %p76
        $region14: #{tpu_custom_call.1} parent=11 // pred_check_branch
          %147 = sbr.rel (%p145) target = $region16
        $region15: #{tpu_custom_call.1} parent=11 // pred_region
          %p148 = scmp.lt.s32.totalorder %s22, 0
          %s149 = scalar_select %p148, %s22, 0
          %s150 = smul.addr %s149, 4
          %s151 = scalar_lea.vmem %s1, %s150
        $region16: #{tpu_custom_call.1} parent=11 // pred_fallthru
          _
        // Predicated region
        $region17: #{tpu_custom_call.1} parent=11 // pred_check
          %p152 = pneg %p102
        $region18: #{tpu_custom_call.1} parent=11 // pred_check_branch
          %154 = sbr.rel (%p152) target = $region20
        $region19: #{tpu_custom_call.1} parent=11 // pred_region
          %p155 = scmp.lt.s32.totalorder %s22, 0
          %s156 = scalar_select %p155, %s22, 0
          %s157 = smul.addr %s156, 8
          %s158 = scalar_lea.vmem %s2, %s157
        $region20: #{tpu_custom_call.1} parent=11 // pred_fallthru
          _
      $region12: #{tpu_custom_call.1} parent=5 // pred_fallthru
        _
      %p159 = scmp.lt.s32.totalorder %s12, 2
      // Predicated region
      $region21: #{tpu_custom_call.1} parent=5 // pred_check
        %p160 = pneg %p159
      $region22: #{tpu_custom_call.1} parent=5 // pred_check_branch
        %162 = sbr.rel (%p160) target = $region24
      $region23: #{tpu_custom_call.1} parent=5 // pred_region
        // Predicated region
        $region25: #{tpu_custom_call.1} parent=23 // pred_check
          %p163 = pneg %p44
        $region26: #{tpu_custom_call.1} parent=23 // pred_check_branch
          %165 = sbr.rel (%p163) target = $region28
        $region27: #{tpu_custom_call.1} parent=23 // pred_region
          %p166 = scmp.lt.s32.totalorder %s19, 1
          %s167 = scalar_select %p166, %s19, 1
          %s168 = smul.addr %s167, 4
          %s169 = smul.addr %s168, 2
          %s170 = scalar_lea.vmem %s0, %s169
        $region28: #{tpu_custom_call.1} parent=23 // pred_fallthru
          _
      $region24: #{tpu_custom_call.1} parent=5 // pred_fallthru
        _
      %p171 = scmp.le.s32.totalorder 1, %s12
      %p172 = scmp.lt.s32.totalorder %s12, 3
      %p173 = pnand %p171, %p172
      %p174 = pneg %p173
      // Predicated region
      $region29: #{tpu_custom_call.1} parent=5 // pred_check
        _
      $region30: #{tpu_custom_call.1} parent=5 // pred_check_branch
        %176 = sbr.rel (%p173) target = $region32
      $region31: #{tpu_custom_call.1} parent=5 // pred_region
        %s177 = ssub.s32 %s12, 1
        %p178 = scmp.lt.s32.totalorder %s21, 1
        %s179 = scalar_select %p178, %s21, 1
        %s180 = smul.addr %s179, 4
        %s181 = smul.addr %s180, 2
        %s182 = scalar_lea.vmem %s0, %s181
        %p183 = pneg %p50
        %p184 = pneg %p47
        %p185 = scmp.lt.s32.totalorder %s22, 0
        %s186 = scalar_select %p185, %s22, 0
        %s187 = smul.addr %s186, 4
        %s188 = scalar_lea.vmem %s1, %s187
        %p189 = pneg %p76
        %p190 = pneg %p73
        %p191 = scmp.lt.s32.totalorder %s22, 0
        %s192 = scalar_select %p191, %s22, 0
        %s193 = smul.addr %s192, 8
        %s194 = scalar_lea.vmem %s2, %s193
        %p195 = pneg %p102
        %p196 = pneg %p99
        %p197 = pneg %p130
        %p198 = pneg %p127
        %s199 = sand.u32 %s117, 1
        %s200 = scalar_lea.sflag [#allocation3], %s199
        %s201 = sand.u32 %s117, 1
        %s202 = smul.addr %s201, 12
        %s203 = scalar_lea.vmem [#allocation2], %s202
        %p204 = scmp.lt.s32.totalorder %s21, 1
        %s205 = scalar_select %p204, %s21, 1
        %s206 = smul.addr %s205, 4
        %s207 = smul.addr %s206, 2
        %s208 = scalar_lea.vmem %s0, %s207
        %p209 = scmp.lt.s32.totalorder %s22, 0
        %s210 = scalar_select %p209, %s22, 0
        %s211 = smul.addr %s210, 4
        %s212 = scalar_lea.vmem %s1, %s211
        %p213 = scmp.lt.s32.totalorder %s22, 0
        %s214 = scalar_select %p213, %s22, 0
        %s215 = smul.addr %s214, 8
        %s216 = scalar_lea.vmem %s2, %s215
        %v218 = vld [vmem:[%s208] sm:$0x3f]
        %v219 = vld [vmem:[%s212] sm:$0xf]
        %v220 = vld [vmem:[%s208] sm:$0xff]
        %s221 = scalar_lea.vmem %s212, 4
        %v222 = vld [vmem:[%s221] sm:$0xf]
        %v224 = vcombine.high %v220, %v220
        %v226 = vunpack.c.l.s4 1983009808
        %v227 = vunpack.c.0.s8 %v226
        %v228 = vlaneseq
        %v229 = vshrl.u32 %v228, 7
        %v230 = vsub.s32 %v227, %v229
        %v231 = vrot.slane %v220, %v230
        %v233 = vunpack.c.l.s4 1983009808
        %v234 = vunpack.c.0.s8 %v233
        %v235 = vlaneseq
        %v236 = vshrl.u32 %v235, 7
        %v237 = vsub.s32 %v234, %v236
        %v238 = vrot.slane %v224, %v237
        %v239 = vcombine.high %v231, %v231
        %v240 = vcombine.high %v238, %v238
        %241 = vrot.lane.b32.xlu0 %v231, 127
        %v242 = vpop.permute.xlu0 %241
        %243 = vrot.lane.b32.xlu0 %v239, 127
        %v244 = vpop.permute.xlu0 %243
        %245 = vrot.lane.b32.xlu0 %v238, 127
        %v246 = vpop.permute.xlu0 %245
        %247 = vrot.lane.b32.xlu0 %v240, 127
        %v248 = vpop.permute.xlu0 %247
        %vm249 = vcmask 1039360
        %v250 = vsel %vm249, %v242, %v244
        %v251 = vsel %vm249, %v244, %v246
        %v252 = vsel %vm249, %v246, %v248
        %vm253 = vcmask 31744
        %v255 = vsel %vm253, %v222, 0
        %vm257 = vcmask 1041408
        %v259 = vsel %vm257, %v250, 0
        %v262 = vsel %vm257, %v251, 0
        %v265 = vsel %vm257, %v252, 0
        %267 = vmatprep.subr.bf16.mxu0 0
        %268 = vmatpush1.bf16.msra.mxu0 0
        %269 = vmatprep.subr.bf16.mxu0 0
        %270 = vmatpush1.bf16.msra.mxu0 0
        %271 = vmatprep.subr.bf16.mxu0 0
        %272 = vmatpush1.bf16.msra.mxu0 0
        %273 = vmatprep.subr.bf16.mxu0 0
        %274 = vmatpush1.bf16.msra.mxu0 0
        %275 = vmatprep.subr.bf16.mxu0 0
        %276 = vmatpush1.bf16.msra.mxu0 0
        %277 = vmatprep.subr.bf16.mxu0 0
        %278 = vmatpush1.bf16.msra.mxu0 0
        %279 = vmatprep.subr.bf16.mxu0 0
        %280 = vmatpush1.bf16.msra.mxu0 0
        %281 = vmatprep.subr.bf16.mxu0 %v262
        %282 = vmatpush1.bf16.msra.mxu0 %v259
        %283 = vmatprep.subr.bf16.mxu0 0
        %284 = vmatpush2.bf16.msra.mxu0 0
        %285 = vmatprep.subr.bf16.mxu0 0
        %286 = vmatpush2.bf16.msra.mxu0 0
        %287 = vmatprep.subr.bf16.mxu0 0
        %288 = vmatpush2.bf16.msra.mxu0 0
        %289 = vmatprep.subr.bf16.mxu0 0
        %290 = vmatpush2.bf16.msra.mxu0 0
        %291 = vmatprep.subr.bf16.mxu0 0
        %292 = vmatpush2.bf16.msra.mxu0 0
        %293 = vmatprep.subr.bf16.mxu0 0
        %294 = vmatpush2.bf16.msra.mxu0 0
        %295 = vmatprep.subr.bf16.mxu0 0
        %296 = vmatpush2.bf16.msra.mxu0 0
        %297 = vmatprep.subr.bf16.mxu0 0
        %298 = vmatpush2.bf16.msra.mxu0 0
        %299 = vmatprep.mubr.bf16.mxu0 0
        %300 = vmatmul.mubr.bf16.gmra.mxu0 %v255
        %v301 = vpop.f32.mrf.mxu0
        %v302 = vadd.f32 0.0, %v301
        %v303 = vpop.f32.mrf.mxu0
        %v304 = vadd.f32 0.0, %v303
        %v305 = vpop.f32.mrf.mxu0
        %v306 = vpop.f32.mrf.mxu0
        %307 = vdwg.mxu0
        %308 = vmatprep.subr.bf16.mxu0 0
        %309 = vmatpush1.bf16.msra.mxu0 0
        %310 = vmatprep.subr.bf16.mxu0 0
        %311 = vmatpush1.bf16.msra.mxu0 0
        %312 = vmatprep.subr.bf16.mxu0 0
        %313 = vmatpush1.bf16.msra.mxu0 0
        %314 = vmatprep.subr.bf16.mxu0 0
        %315 = vmatpush1.bf16.msra.mxu0 0
        %316 = vmatprep.subr.bf16.mxu0 0
        %317 = vmatpush1.bf16.msra.mxu0 0
        %318 = vmatprep.subr.bf16.mxu0 0
        %319 = vmatpush1.bf16.msra.mxu0 0
        %320 = vmatprep.subr.bf16.mxu0 0
        %321 = vmatpush1.bf16.msra.mxu0 0
        %322 = vmatprep.subr.bf16.mxu0 0
        %323 = vmatpush1.bf16.msra.mxu0 %v265
        %324 = vmatprep.subr.bf16.mxu0 0
        %325 = vmatpush2.bf16.msra.mxu0 0
        %326 = vmatprep.subr.bf16.mxu0 0
        %327 = vmatpush2.bf16.msra.mxu0 0
        %328 = vmatprep.subr.bf16.mxu0 0
        %329 = vmatpush2.bf16.msra.mxu0 0
        %330 = vmatprep.subr.bf16.mxu0 0
        %331 = vmatpush2.bf16.msra.mxu0 0
        %332 = vmatprep.subr.bf16.mxu0 0
        %333 = vmatpush2.bf16.msra.mxu0 0
        %334 = vmatprep.subr.bf16.mxu0 0
        %335 = vmatpush2.bf16.msra.mxu0 0
        %336 = vmatprep.subr.bf16.mxu0 0
        %337 = vmatpush2.bf16.msra.mxu0 0
        %338 = vmatprep.subr.bf16.mxu0 0
        %339 = vmatpush2.bf16.msra.mxu0 0
        %340 = vmatprep.mubr.bf16.mxu0 0
        %341 = vmatmul.mubr.bf16.gmra.mxu0 %v255
        %v342 = vpop.f32.mrf.mxu0
        %v343 = vadd.f32 0.0, %v342
        %v344 = vpop.f32.mrf.mxu0
        %v345 = vpop.f32.mrf.mxu0
        %v346 = vpop.f32.mrf.mxu0
        %347 = vdwg.mxu0
        %v349 = vcombine.high %v218, %v218
        %v351 = vunpack.c.l.s4 1983009808
        %v352 = vunpack.c.0.s8 %v351
        %v353 = vlaneseq
        %v354 = vshrl.u32 %v353, 7
        %v355 = vsub.s32 %v352, %v354
        %v356 = vrot.slane %v218, %v355
        %v358 = vunpack.c.l.s4 1983009808
        %v359 = vunpack.c.0.s8 %v358
        %v360 = vlaneseq
        %v361 = vshrl.u32 %v360, 7
        %v362 = vsub.s32 %v359, %v361
        %v363 = vrot.slane %v349, %v362
        %v364 = vcombine.high %v356, %v356
        %v366 = vsel %vm253, %v219, 0
        %v369 = vsel %vm257, %v356, 0
        %v372 = vsel %vm257, %v364, 0
        %v375 = vsel %vm257, %v363, 0
        %377 = vmatprep.subr.bf16.mxu0 0
        %378 = vmatpush1.bf16.msra.mxu0 0
        %379 = vmatprep.subr.bf16.mxu0 0
        %380 = vmatpush1.bf16.msra.mxu0 0
        %381 = vmatprep.subr.bf16.mxu0 0
        %382 = vmatpush1.bf16.msra.mxu0 0
        %383 = vmatprep.subr.bf16.mxu0 0
        %384 = vmatpush1.bf16.msra.mxu0 0
        %385 = vmatprep.subr.bf16.mxu0 0
        %386 = vmatpush1.bf16.msra.mxu0 0
        %387 = vmatprep.subr.bf16.mxu0 0
        %388 = vmatpush1.bf16.msra.mxu0 0
        %389 = vmatprep.subr.bf16.mxu0 0
        %390 = vmatpush1.bf16.msra.mxu0 0
        %391 = vmatprep.subr.bf16.mxu0 %v372
        %392 = vmatpush1.bf16.msra.mxu0 %v369
        %393 = vmatprep.subr.bf16.mxu0 0
        %394 = vmatpush2.bf16.msra.mxu0 0
        %395 = vmatprep.subr.bf16.mxu0 0
        %396 = vmatpush2.bf16.msra.mxu0 0
        %397 = vmatprep.subr.bf16.mxu0 0
        %398 = vmatpush2.bf16.msra.mxu0 0
        %399 = vmatprep.subr.bf16.mxu0 0
        %400 = vmatpush2.bf16.msra.mxu0 0
        %401 = vmatprep.subr.bf16.mxu0 0
        %402 = vmatpush2.bf16.msra.mxu0 0
        %403 = vmatprep.subr.bf16.mxu0 0
        %404 = vmatpush2.bf16.msra.mxu0 0
        %405 = vmatprep.subr.bf16.mxu0 0
        %406 = vmatpush2.bf16.msra.mxu0 0
        %407 = vmatprep.subr.bf16.mxu0 0
        %408 = vmatpush2.bf16.msra.mxu0 0
        %409 = vmatprep.mubr.bf16.mxu0 0
        %410 = vmatmul.mubr.bf16.gmra.mxu0 %v366
        %v411 = vpop.f32.mrf.mxu0
        %v412 = vadd.f32 %v302, %v411
        %v413 = vpop.f32.mrf.mxu0
        %v414 = vadd.f32 %v304, %v413
        %v415 = vpop.f32.mrf.mxu0
        %v416 = vpop.f32.mrf.mxu0
        %417 = vdwg.mxu0
        %418 = vmatprep.subr.bf16.mxu0 0
        %419 = vmatpush1.bf16.msra.mxu0 0
        %420 = vmatprep.subr.bf16.mxu0 0
        %421 = vmatpush1.bf16.msra.mxu0 0
        %422 = vmatprep.subr.bf16.mxu0 0
        %423 = vmatpush1.bf16.msra.mxu0 0
        %424 = vmatprep.subr.bf16.mxu0 0
        %425 = vmatpush1.bf16.msra.mxu0 0
        %426 = vmatprep.subr.bf16.mxu0 0
        %427 = vmatpush1.bf16.msra.mxu0 0
        %428 = vmatprep.subr.bf16.mxu0 0
        %429 = vmatpush1.bf16.msra.mxu0 0
        %430 = vmatprep.subr.bf16.mxu0 0
        %431 = vmatpush1.bf16.msra.mxu0 0
        %432 = vmatprep.subr.bf16.mxu0 0
        %433 = vmatpush1.bf16.msra.mxu0 %v375
        %434 = vmatprep.subr.bf16.mxu0 0
        %435 = vmatpush2.bf16.msra.mxu0 0
        %436 = vmatprep.subr.bf16.mxu0 0
        %437 = vmatpush2.bf16.msra.mxu0 0
        %438 = vmatprep.subr.bf16.mxu0 0
        %439 = vmatpush2.bf16.msra.mxu0 0
        %440 = vmatprep.subr.bf16.mxu0 0
        %441 = vmatpush2.bf16.msra.mxu0 0
        %442 = vmatprep.subr.bf16.mxu0 0
        %443 = vmatpush2.bf16.msra.mxu0 0
        %444 = vmatprep.subr.bf16.mxu0 0
        %445 = vmatpush2.bf16.msra.mxu0 0
        %446 = vmatprep.subr.bf16.mxu0 0
        %447 = vmatpush2.bf16.msra.mxu0 0
        %448 = vmatprep.subr.bf16.mxu0 0
        %449 = vmatpush2.bf16.msra.mxu0 0
        %450 = vmatprep.mubr.bf16.mxu0 0
        %451 = vmatmul.mubr.bf16.gmra.mxu0 %v366
        %v452 = vpop.f32.mrf.mxu0
        %v453 = vadd.f32 %v343, %v452
        %v454 = vpop.f32.mrf.mxu0
        %v455 = vpop.f32.mrf.mxu0
        %v456 = vpop.f32.mrf.mxu0
        %457 = vdwg.mxu0
        %v458 = vld [vmem:[%s208] sm:$0xff]
        %s459 = scalar_lea.vmem %s212, 8
        %v460 = vld [vmem:[%s459] sm:$0xf]
        %v462 = vcombine.high %v458, %v458
        %v464 = vunpack.c.l.s4 1983009808
        %v465 = vunpack.c.0.s8 %v464
        %v466 = vlaneseq
        %v467 = vshrl.u32 %v466, 7
        %v468 = vsub.s32 %v465, %v467
        %v469 = vrot.slane %v458, %v468
        %v471 = vunpack.c.l.s4 1983009808
        %v472 = vunpack.c.0.s8 %v471
        %v473 = vlaneseq
        %v474 = vshrl.u32 %v473, 7
        %v475 = vsub.s32 %v472, %v474
        %v476 = vrot.slane %v462, %v475
        %v477 = vcombine.high %v469, %v469
        %v478 = vcombine.high %v476, %v476
        %479 = vrot.lane.b32.xlu0 %v469, 126
        %v480 = vpop.permute.xlu0 %479
        %481 = vrot.lane.b32.xlu0 %v477, 126
        %v482 = vpop.permute.xlu0 %481
        %483 = vrot.lane.b32.xlu0 %v476, 126
        %v484 = vpop.permute.xlu0 %483
        %485 = vrot.lane.b32.xlu0 %v478, 126
        %v486 = vpop.permute.xlu0 %485
        %vm487 = vcmask 1031168
        %v488 = vsel %vm487, %v480, %v482
        %v489 = vsel %vm487, %v482, %v484
        %v490 = vsel %vm487, %v484, %v486
        %v492 = vsel %vm253, %v460, 0
        %v495 = vsel %vm257, %v488, 0
        %v498 = vsel %vm257, %v489, 0
        %v501 = vsel %vm257, %v490, 0
        %503 = vmatprep.subr.bf16.mxu0 0
        %504 = vmatpush1.bf16.msra.mxu0 0
        %505 = vmatprep.subr.bf16.mxu0 0
        %506 = vmatpush1.bf16.msra.mxu0 0
        %507 = vmatprep.subr.bf16.mxu0 0
        %508 = vmatpush1.bf16.msra.mxu0 0
        %509 = vmatprep.subr.bf16.mxu0 0
        %510 = vmatpush1.bf16.msra.mxu0 0
        %511 = vmatprep.subr.bf16.mxu0 0
        %512 = vmatpush1.bf16.msra.mxu0 0
        %513 = vmatprep.subr.bf16.mxu0 0
        %514 = vmatpush1.bf16.msra.mxu0 0
        %515 = vmatprep.subr.bf16.mxu0 0
        %516 = vmatpush1.bf16.msra.mxu0 0
        %517 = vmatprep.subr.bf16.mxu0 %v498
        %518 = vmatpush1.bf16.msra.mxu0 %v495
        %519 = vmatprep.subr.bf16.mxu0 0
        %520 = vmatpush2.bf16.msra.mxu0 0
        %521 = vmatprep.subr.bf16.mxu0 0
        %522 = vmatpush2.bf16.msra.mxu0 0
        %523 = vmatprep.subr.bf16.mxu0 0
        %524 = vmatpush2.bf16.msra.mxu0 0
        %525 = vmatprep.subr.bf16.mxu0 0
        %526 = vmatpush2.bf16.msra.mxu0 0
        %527 = vmatprep.subr.bf16.mxu0 0
        %528 = vmatpush2.bf16.msra.mxu0 0
        %529 = vmatprep.subr.bf16.mxu0 0
        %530 = vmatpush2.bf16.msra.mxu0 0
        %531 = vmatprep.subr.bf16.mxu0 0
        %532 = vmatpush2.bf16.msra.mxu0 0
        %533 = vmatprep.subr.bf16.mxu0 0
        %534 = vmatpush2.bf16.msra.mxu0 0
        %535 = vmatprep.mubr.bf16.mxu0 0
        %536 = vmatmul.mubr.bf16.gmra.mxu0 %v492
        %v537 = vpop.f32.mrf.mxu0
        %v538 = vadd.f32 0.0, %v537
        %v539 = vpop.f32.mrf.mxu0
        %v540 = vadd.f32 0.0, %v539
        %v541 = vpop.f32.mrf.mxu0
        %v542 = vpop.f32.mrf.mxu0
        %543 = vdwg.mxu0
        %544 = vmatprep.subr.bf16.mxu0 0
        %545 = vmatpush1.bf16.msra.mxu0 0
        %546 = vmatprep.subr.bf16.mxu0 0
        %547 = vmatpush1.bf16.msra.mxu0 0
        %548 = vmatprep.subr.bf16.mxu0 0
        %549 = vmatpush1.bf16.msra.mxu0 0
        %550 = vmatprep.subr.bf16.mxu0 0
        %551 = vmatpush1.bf16.msra.mxu0 0
        %552 = vmatprep.subr.bf16.mxu0 0
        %553 = vmatpush1.bf16.msra.mxu0 0
        %554 = vmatprep.subr.bf16.mxu0 0
        %555 = vmatpush1.bf16.msra.mxu0 0
        %556 = vmatprep.subr.bf16.mxu0 0
        %557 = vmatpush1.bf16.msra.mxu0 0
        %558 = vmatprep.subr.bf16.mxu0 0
        %559 = vmatpush1.bf16.msra.mxu0 %v501
        %560 = vmatprep.subr.bf16.mxu0 0
        %561 = vmatpush2.bf16.msra.mxu0 0
        %562 = vmatprep.subr.bf16.mxu0 0
        %563 = vmatpush2.bf16.msra.mxu0 0
        %564 = vmatprep.subr.bf16.mxu0 0
        %565 = vmatpush2.bf16.msra.mxu0 0
        %566 = vmatprep.subr.bf16.mxu0 0
        %567 = vmatpush2.bf16.msra.mxu0 0
        %568 = vmatprep.subr.bf16.mxu0 0
        %569 = vmatpush2.bf16.msra.mxu0 0
        %570 = vmatprep.subr.bf16.mxu0 0
        %571 = vmatpush2.bf16.msra.mxu0 0
        %572 = vmatprep.subr.bf16.mxu0 0
        %573 = vmatpush2.bf16.msra.mxu0 0
        %574 = vmatprep.subr.bf16.mxu0 0
        %575 = vmatpush2.bf16.msra.mxu0 0
        %576 = vmatprep.mubr.bf16.mxu0 0
        %577 = vmatmul.mubr.bf16.gmra.mxu0 %v492
        %v578 = vpop.f32.mrf.mxu0
        %v579 = vadd.f32 0.0, %v578
        %v580 = vpop.f32.mrf.mxu0
        %v581 = vpop.f32.mrf.mxu0
        %v582 = vpop.f32.mrf.mxu0
        %583 = vdwg.mxu0
        %v584 = vadd.f32 %v412, %v538
        %v585 = vadd.f32 %v414, %v540
        %v586 = vadd.f32 %v453, %v579
        %v587 = vld [vmem:[%s208] sm:$0xff]
        %s588 = scalar_lea.vmem %s212, 12
        %v589 = vld [vmem:[%s588] sm:$0xf]
        %v591 = vcombine.high %v587, %v587
        %v593 = vunpack.c.l.s4 1983009808
        %v594 = vunpack.c.0.s8 %v593
        %v595 = vlaneseq
        %v596 = vshrl.u32 %v595, 7
        %v597 = vsub.s32 %v594, %v596
        %v598 = vrot.slane %v587, %v597
        %v600 = vunpack.c.l.s4 1983009808
        %v601 = vunpack.c.0.s8 %v600
        %v602 = vlaneseq
        %v603 = vshrl.u32 %v602, 7
        %v604 = vsub.s32 %v601, %v603
        %v605 = vrot.slane %v591, %v604
        %v606 = vcombine.high %v598, %v598
        %v607 = vcombine.high %v605, %v605
        %608 = vrot.lane.b32.xlu0 %v598, 110
        %v609 = vpop.permute.xlu0 %608
        %610 = vrot.lane.b32.xlu0 %v606, 110
        %v611 = vpop.permute.xlu0 %610
        %612 = vrot.lane.b32.xlu0 %v605, 110
        %v613 = vpop.permute.xlu0 %612
        %614 = vrot.lane.b32.xlu0 %v607, 110
        %v615 = vpop.permute.xlu0 %614
        %vm616 = vcmask 900096
        %v617 = vsel %vm616, %v609, %v611
        %v618 = vsel %vm616, %v611, %v613
        %v619 = vsel %vm616, %v613, %v615
        %v621 = vsel %vm253, %v589, 0
        %v624 = vsel %vm257, %v617, 0
        %v627 = vsel %vm257, %v618, 0
        %v630 = vsel %vm257, %v619, 0
        %632 = vmatprep.subr.bf16.mxu0 0
        %633 = vmatpush1.bf16.msra.mxu0 0
        %634 = vmatprep.subr.bf16.mxu0 0
        %635 = vmatpush1.bf16.msra.mxu0 0
        %636 = vmatprep.subr.bf16.mxu0 0
        %637 = vmatpush1.bf16.msra.mxu0 0
        %638 = vmatprep.subr.bf16.mxu0 0
        %639 = vmatpush1.bf16.msra.mxu0 0
        %640 = vmatprep.subr.bf16.mxu0 0
        %641 = vmatpush1.bf16.msra.mxu0 0
        %642 = vmatprep.subr.bf16.mxu0 0
        %643 = vmatpush1.bf16.msra.mxu0 0
        %644 = vmatprep.subr.bf16.mxu0 0
        %645 = vmatpush1.bf16.msra.mxu0 0
        %646 = vmatprep.subr.bf16.mxu0 %v627
        %647 = vmatpush1.bf16.msra.mxu0 %v624
        %648 = vmatprep.subr.bf16.mxu0 0
        %649 = vmatpush2.bf16.msra.mxu0 0
        %650 = vmatprep.subr.bf16.mxu0 0
        %651 = vmatpush2.bf16.msra.mxu0 0
        %652 = vmatprep.subr.bf16.mxu0 0
        %653 = vmatpush2.bf16.msra.mxu0 0
        %654 = vmatprep.subr.bf16.mxu0 0
        %655 = vmatpush2.bf16.msra.mxu0 0
        %656 = vmatprep.subr.bf16.mxu0 0
        %657 = vmatpush2.bf16.msra.mxu0 0
        %658 = vmatprep.subr.bf16.mxu0 0
        %659 = vmatpush2.bf16.msra.mxu0 0
        %660 = vmatprep.subr.bf16.mxu0 0
        %661 = vmatpush2.bf16.msra.mxu0 0
        %662 = vmatprep.subr.bf16.mxu0 0
        %663 = vmatpush2.bf16.msra.mxu0 0
        %664 = vmatprep.mubr.bf16.mxu0 0
        %665 = vmatmul.mubr.bf16.gmra.mxu0 %v621
        %v666 = vpop.f32.mrf.mxu0
        %v667 = vadd.f32 0.0, %v666
        %v668 = vpop.f32.mrf.mxu0
        %v669 = vadd.f32 0.0, %v668
        %v670 = vpop.f32.mrf.mxu0
        %v671 = vpop.f32.mrf.mxu0
        %672 = vdwg.mxu0
        %673 = vmatprep.subr.bf16.mxu0 0
        %674 = vmatpush1.bf16.msra.mxu0 0
        %675 = vmatprep.subr.bf16.mxu0 0
        %676 = vmatpush1.bf16.msra.mxu0 0
        %677 = vmatprep.subr.bf16.mxu0 0
        %678 = vmatpush1.bf16.msra.mxu0 0
        %679 = vmatprep.subr.bf16.mxu0 0
        %680 = vmatpush1.bf16.msra.mxu0 0
        %681 = vmatprep.subr.bf16.mxu0 0
        %682 = vmatpush1.bf16.msra.mxu0 0
        %683 = vmatprep.subr.bf16.mxu0 0
        %684 = vmatpush1.bf16.msra.mxu0 0
        %685 = vmatprep.subr.bf16.mxu0 0
        %686 = vmatpush1.bf16.msra.mxu0 0
        %687 = vmatprep.subr.bf16.mxu0 0
        %688 = vmatpush1.bf16.msra.mxu0 %v630
        %689 = vmatprep.subr.bf16.mxu0 0
        %690 = vmatpush2.bf16.msra.mxu0 0
        %691 = vmatprep.subr.bf16.mxu0 0
        %692 = vmatpush2.bf16.msra.mxu0 0
        %693 = vmatprep.subr.bf16.mxu0 0
        %694 = vmatpush2.bf16.msra.mxu0 0
        %695 = vmatprep.subr.bf16.mxu0 0
        %696 = vmatpush2.bf16.msra.mxu0 0
        %697 = vmatprep.subr.bf16.mxu0 0
        %698 = vmatpush2.bf16.msra.mxu0 0
        %699 = vmatprep.subr.bf16.mxu0 0
        %700 = vmatpush2.bf16.msra.mxu0 0
        %701 = vmatprep.subr.bf16.mxu0 0
        %702 = vmatpush2.bf16.msra.mxu0 0
        %703 = vmatprep.subr.bf16.mxu0 0
        %704 = vmatpush2.bf16.msra.mxu0 0
        %705 = vmatprep.mubr.bf16.mxu0 0
        %706 = vmatmul.mubr.bf16.gmra.mxu0 %v621
        %v707 = vpop.f32.mrf.mxu0
        %v708 = vadd.f32 0.0, %v707
        %v709 = vpop.f32.mrf.mxu0
        %v710 = vpop.f32.mrf.mxu0
        %v711 = vpop.f32.mrf.mxu0
        %712 = vdwg.mxu0
        %v713 = vadd.f32 %v584, %v667
        %v714 = vadd.f32 %v585, %v669
        %v715 = vadd.f32 %v586, %v708
        %v716 = vld [vmem:[%s208] sm:$0xff]
        %s717 = scalar_lea.vmem %s212, 16
        %v718 = vld [vmem:[%s717] sm:$0xf]
        %v720 = vcombine.high %v716, %v716
        %v722 = vunpack.c.l.s4 1983009808
        %v723 = vunpack.c.0.s8 %v722
        %v724 = vlaneseq
        %v725 = vshrl.u32 %v724, 7
        %v726 = vsub.s32 %v723, %v725
        %v727 = vrot.slane %v716, %v726
        %v729 = vunpack.c.l.s4 1983009808
        %v730 = vunpack.c.0.s8 %v729
        %v731 = vlaneseq
        %v732 = vshrl.u32 %v731, 7
        %v733 = vsub.s32 %v730, %v732
        %v734 = vrot.slane %v720, %v733
        %v735 = vcombine.high %v727, %v727
        %v736 = vcombine.high %v734, %v734
        %737 = vrot.lane.b32.xlu0 %v727, 109
        %v738 = vpop.permute.xlu0 %737
        %739 = vrot.lane.b32.xlu0 %v735, 109
        %v740 = vpop.permute.xlu0 %739
        %741 = vrot.lane.b32.xlu0 %v734, 109
        %v742 = vpop.permute.xlu0 %741
        %743 = vrot.lane.b32.xlu0 %v736, 109
        %v744 = vpop.permute.xlu0 %743
        %vm745 = vcmask 891904
        %v746 = vsel %vm745, %v738, %v740
        %v747 = vsel %vm745, %v740, %v742
        %v748 = vsel %vm745, %v742, %v744
        %v750 = vsel %vm253, %v718, 0
        %v753 = vsel %vm257, %v746, 0
        %v756 = vsel %vm257, %v747, 0
        %v759 = vsel %vm257, %v748, 0
        %761 = vmatprep.subr.bf16.mxu0 0
        %762 = vmatpush1.bf16.msra.mxu0 0
        %763 = vmatprep.subr.bf16.mxu0 0
        %764 = vmatpush1.bf16.msra.mxu0 0
        %765 = vmatprep.subr.bf16.mxu0 0
        %766 = vmatpush1.bf16.msra.mxu0 0
        %767 = vmatprep.subr.bf16.mxu0 0
        %768 = vmatpush1.bf16.msra.mxu0 0
        %769 = vmatprep.subr.bf16.mxu0 0
        %770 = vmatpush1.bf16.msra.mxu0 0
        %771 = vmatprep.subr.bf16.mxu0 0
        %772 = vmatpush1.bf16.msra.mxu0 0
        %773 = vmatprep.subr.bf16.mxu0 0
        %774 = vmatpush1.bf16.msra.mxu0 0
        %775 = vmatprep.subr.bf16.mxu0 %v756
        %776 = vmatpush1.bf16.msra.mxu0 %v753
        %777 = vmatprep.subr.bf16.mxu0 0
        %778 = vmatpush2.bf16.msra.mxu0 0
        %779 = vmatprep.subr.bf16.mxu0 0
        %780 = vmatpush2.bf16.msra.mxu0 0
        %781 = vmatprep.subr.bf16.mxu0 0
        %782 = vmatpush2.bf16.msra.mxu0 0
        %783 = vmatprep.subr.bf16.mxu0 0
        %784 = vmatpush2.bf16.msra.mxu0 0
        %785 = vmatprep.subr.bf16.mxu0 0
        %786 = vmatpush2.bf16.msra.mxu0 0
        %787 = vmatprep.subr.bf16.mxu0 0
        %788 = vmatpush2.bf16.msra.mxu0 0
        %789 = vmatprep.subr.bf16.mxu0 0
        %790 = vmatpush2.bf16.msra.mxu0 0
        %791 = vmatprep.subr.bf16.mxu0 0
        %792 = vmatpush2.bf16.msra.mxu0 0
        %793 = vmatprep.mubr.bf16.mxu0 0
        %794 = vmatmul.mubr.bf16.gmra.mxu0 %v750
        %v795 = vpop.f32.mrf.mxu0
        %v796 = vadd.f32 0.0, %v795
        %v797 = vpop.f32.mrf.mxu0
        %v798 = vadd.f32 0.0, %v797
        %v799 = vpop.f32.mrf.mxu0
        %v800 = vpop.f32.mrf.mxu0
        %801 = vdwg.mxu0
        %802 = vmatprep.subr.bf16.mxu0 0
        %803 = vmatpush1.bf16.msra.mxu0 0
        %804 = vmatprep.subr.bf16.mxu0 0
        %805 = vmatpush1.bf16.msra.mxu0 0
        %806 = vmatprep.subr.bf16.mxu0 0
        %807 = vmatpush1.bf16.msra.mxu0 0
        %808 = vmatprep.subr.bf16.mxu0 0
        %809 = vmatpush1.bf16.msra.mxu0 0
        %810 = vmatprep.subr.bf16.mxu0 0
        %811 = vmatpush1.bf16.msra.mxu0 0
        %812 = vmatprep.subr.bf16.mxu0 0
        %813 = vmatpush1.bf16.msra.mxu0 0
        %814 = vmatprep.subr.bf16.mxu0 0
        %815 = vmatpush1.bf16.msra.mxu0 0
        %816 = vmatprep.subr.bf16.mxu0 0
        %817 = vmatpush1.bf16.msra.mxu0 %v759
        %818 = vmatprep.subr.bf16.mxu0 0
        %819 = vmatpush2.bf16.msra.mxu0 0
        %820 = vmatprep.subr.bf16.mxu0 0
        %821 = vmatpush2.bf16.msra.mxu0 0
        %822 = vmatprep.subr.bf16.mxu0 0
        %823 = vmatpush2.bf16.msra.mxu0 0
        %824 = vmatprep.subr.bf16.mxu0 0
        %825 = vmatpush2.bf16.msra.mxu0 0
        %826 = vmatprep.subr.bf16.mxu0 0
        %827 = vmatpush2.bf16.msra.mxu0 0
        %828 = vmatprep.subr.bf16.mxu0 0
        %829 = vmatpush2.bf16.msra.mxu0 0
        %830 = vmatprep.subr.bf16.mxu0 0
        %831 = vmatpush2.bf16.msra.mxu0 0
        %832 = vmatprep.subr.bf16.mxu0 0
        %833 = vmatpush2.bf16.msra.mxu0 0
        %834 = vmatprep.mubr.bf16.mxu0 0
        %835 = vmatmul.mubr.bf16.gmra.mxu0 %v750
        %v836 = vpop.f32.mrf.mxu0
        %v837 = vadd.f32 0.0, %v836
        %v838 = vpop.f32.mrf.mxu0
        %v839 = vpop.f32.mrf.mxu0
        %v840 = vpop.f32.mrf.mxu0
        %841 = vdwg.mxu0
        %v842 = vadd.f32 %v713, %v796
        %v843 = vadd.f32 %v714, %v798
        %v844 = vadd.f32 %v715, %v837
        %v845 = vld [vmem:[%s208] sm:$0xff]
        %s846 = scalar_lea.vmem %s212, 20
        %v847 = vld [vmem:[%s846] sm:$0xf]
        %v849 = vcombine.high %v845, %v845
        %v851 = vunpack.c.l.s4 1983009808
        %v852 = vunpack.c.0.s8 %v851
        %v853 = vlaneseq
        %v854 = vshrl.u32 %v853, 7
        %v855 = vsub.s32 %v852, %v854
        %v856 = vrot.slane %v845, %v855
        %v858 = vunpack.c.l.s4 1983009808
        %v859 = vunpack.c.0.s8 %v858
        %v860 = vlaneseq
        %v861 = vshrl.u32 %v860, 7
        %v862 = vsub.s32 %v859, %v861
        %v863 = vrot.slane %v849, %v862
        %v864 = vcombine.high %v856, %v856
        %v865 = vcombine.high %v863, %v863
        %866 = vrot.lane.b32.xlu0 %v856, 108
        %v867 = vpop.permute.xlu0 %866
        %868 = vrot.lane.b32.xlu0 %v864, 108
        %v869 = vpop.permute.xlu0 %868
        %870 = vrot.lane.b32.xlu0 %v863, 108
        %v871 = vpop.permute.xlu0 %870
        %872 = vrot.lane.b32.xlu0 %v865, 108
        %v873 = vpop.permute.xlu0 %872
        %vm874 = vcmask 883712
        %v875 = vsel %vm874, %v867, %v869
        %v876 = vsel %vm874, %v869, %v871
        %v877 = vsel %vm874, %v871, %v873
        %v879 = vsel %vm253, %v847, 0
        %v882 = vsel %vm257, %v875, 0
        %v885 = vsel %vm257, %v876, 0
        %v888 = vsel %vm257, %v877, 0
        %890 = vmatprep.subr.bf16.mxu0 0
        %891 = vmatpush1.bf16.msra.mxu0 0
        %892 = vmatprep.subr.bf16.mxu0 0
        %893 = vmatpush1.bf16.msra.mxu0 0
        %894 = vmatprep.subr.bf16.mxu0 0
        %895 = vmatpush1.bf16.msra.mxu0 0
        %896 = vmatprep.subr.bf16.mxu0 0
        %897 = vmatpush1.bf16.msra.mxu0 0
        %898 = vmatprep.subr.bf16.mxu0 0
        %899 = vmatpush1.bf16.msra.mxu0 0
        %900 = vmatprep.subr.bf16.mxu0 0
        %901 = vmatpush1.bf16.msra.mxu0 0
        %902 = vmatprep.subr.bf16.mxu0 0
        %903 = vmatpush1.bf16.msra.mxu0 0
        %904 = vmatprep.subr.bf16.mxu0 %v885
        %905 = vmatpush1.bf16.msra.mxu0 %v882
        %906 = vmatprep.subr.bf16.mxu0 0
        %907 = vmatpush2.bf16.msra.mxu0 0
        %908 = vmatprep.subr.bf16.mxu0 0
        %909 = vmatpush2.bf16.msra.mxu0 0
        %910 = vmatprep.subr.bf16.mxu0 0
        %911 = vmatpush2.bf16.msra.mxu0 0
        %912 = vmatprep.subr.bf16.mxu0 0
        %913 = vmatpush2.bf16.msra.mxu0 0
        %914 = vmatprep.subr.bf16.mxu0 0
        %915 = vmatpush2.bf16.msra.mxu0 0
        %916 = vmatprep.subr.bf16.mxu0 0
        %917 = vmatpush2.bf16.msra.mxu0 0
        %918 = vmatprep.subr.bf16.mxu0 0
        %919 = vmatpush2.bf16.msra.mxu0 0
        %920 = vmatprep.subr.bf16.mxu0 0
        %921 = vmatpush2.bf16.msra.mxu0 0
        %922 = vmatprep.mubr.bf16.mxu0 0
        %923 = vmatmul.mubr.bf16.gmra.mxu0 %v879
        %v924 = vpop.f32.mrf.mxu0
        %v925 = vadd.f32 0.0, %v924
        %v926 = vpop.f32.mrf.mxu0
        %v927 = vadd.f32 0.0, %v926
        %v928 = vpop.f32.mrf.mxu0
        %v929 = vpop.f32.mrf.mxu0
        %930 = vdwg.mxu0
        %931 = vmatprep.subr.bf16.mxu0 0
        %932 = vmatpush1.bf16.msra.mxu0 0
        %933 = vmatprep.subr.bf16.mxu0 0
        %934 = vmatpush1.bf16.msra.mxu0 0
        %935 = vmatprep.subr.bf16.mxu0 0
        %936 = vmatpush1.bf16.msra.mxu0 0
        %937 = vmatprep.subr.bf16.mxu0 0
        %938 = vmatpush1.bf16.msra.mxu0 0
        %939 = vmatprep.subr.bf16.mxu0 0
        %940 = vmatpush1.bf16.msra.mxu0 0
        %941 = vmatprep.subr.bf16.mxu0 0
        %942 = vmatpush1.bf16.msra.mxu0 0
        %943 = vmatprep.subr.bf16.mxu0 0
        %944 = vmatpush1.bf16.msra.mxu0 0
        %945 = vmatprep.subr.bf16.mxu0 0
        %946 = vmatpush1.bf16.msra.mxu0 %v888
        %947 = vmatprep.subr.bf16.mxu0 0
        %948 = vmatpush2.bf16.msra.mxu0 0
        %949 = vmatprep.subr.bf16.mxu0 0
        %950 = vmatpush2.bf16.msra.mxu0 0
        %951 = vmatprep.subr.bf16.mxu0 0
        %952 = vmatpush2.bf16.msra.mxu0 0
        %953 = vmatprep.subr.bf16.mxu0 0
        %954 = vmatpush2.bf16.msra.mxu0 0
        %955 = vmatprep.subr.bf16.mxu0 0
        %956 = vmatpush2.bf16.msra.mxu0 0
        %957 = vmatprep.subr.bf16.mxu0 0
        %958 = vmatpush2.bf16.msra.mxu0 0
        %959 = vmatprep.subr.bf16.mxu0 0
        %960 = vmatpush2.bf16.msra.mxu0 0
        %961 = vmatprep.subr.bf16.mxu0 0
        %962 = vmatpush2.bf16.msra.mxu0 0
        %963 = vmatprep.mubr.bf16.mxu0 0
        %964 = vmatmul.mubr.bf16.gmra.mxu0 %v879
        %v965 = vpop.f32.mrf.mxu0
        %v966 = vadd.f32 0.0, %v965
        %v967 = vpop.f32.mrf.mxu0
        %v968 = vpop.f32.mrf.mxu0
        %v969 = vpop.f32.mrf.mxu0
        %970 = vdwg.mxu0
        %v971 = vadd.f32 %v842, %v925
        %v972 = vadd.f32 %v843, %v927
        %v973 = vadd.f32 %v844, %v966
        %v974 = vld [vmem:[%s208] sm:$0xff]
        %s975 = scalar_lea.vmem %s212, 24
        %v976 = vld [vmem:[%s975] sm:$0xf]
        %v978 = vcombine.high %v974, %v974
        %v980 = vunpack.c.l.s4 1983009808
        %v981 = vunpack.c.0.s8 %v980
        %v982 = vlaneseq
        %v983 = vshrl.u32 %v982, 7
        %v984 = vsub.s32 %v981, %v983
        %v985 = vrot.slane %v974, %v984
        %v987 = vunpack.c.l.s4 1983009808
        %v988 = vunpack.c.0.s8 %v987
        %v989 = vlaneseq
        %v990 = vshrl.u32 %v989, 7
        %v991 = vsub.s32 %v988, %v990
        %v992 = vrot.slane %v978, %v991
        %v993 = vcombine.high %v985, %v985
        %v994 = vcombine.high %v992, %v992
        %995 = vrot.lane.b32.xlu0 %v985, 92
        %v996 = vpop.permute.xlu0 %995
        %997 = vrot.lane.b32.xlu0 %v993, 92
        %v998 = vpop.permute.xlu0 %997
        %999 = vrot.lane.b32.xlu0 %v992, 92
        %v1000 = vpop.permute.xlu0 %999
        %1001 = vrot.lane.b32.xlu0 %v994, 92
        %v1002 = vpop.permute.xlu0 %1001
        %vm1003 = vcmask 752640
        %v1004 = vsel %vm1003, %v996, %v998
        %v1005 = vsel %vm1003, %v998, %v1000
        %v1006 = vsel %vm1003, %v1000, %v1002
        %v1008 = vsel %vm253, %v976, 0
        %v1011 = vsel %vm257, %v1004, 0
        %v1014 = vsel %vm257, %v1005, 0
        %v1017 = vsel %vm257, %v1006, 0
        %1019 = vmatprep.subr.bf16.mxu0 0
        %1020 = vmatpush1.bf16.msra.mxu0 0
        %1021 = vmatprep.subr.bf16.mxu0 0
        %1022 = vmatpush1.bf16.msra.mxu0 0
        %1023 = vmatprep.subr.bf16.mxu0 0
        %1024 = vmatpush1.bf16.msra.mxu0 0
        %1025 = vmatprep.subr.bf16.mxu0 0
        %1026 = vmatpush1.bf16.msra.mxu0 0
        %1027 = vmatprep.subr.bf16.mxu0 0
        %1028 = vmatpush1.bf16.msra.mxu0 0
        %1029 = vmatprep.subr.bf16.mxu0 0
        %1030 = vmatpush1.bf16.msra.mxu0 0
        %1031 = vmatprep.subr.bf16.mxu0 0
        %1032 = vmatpush1.bf16.msra.mxu0 0
        %1033 = vmatprep.subr.bf16.mxu0 %v1014
        %1034 = vmatpush1.bf16.msra.mxu0 %v1011
        %1035 = vmatprep.subr.bf16.mxu0 0
        %1036 = vmatpush2.bf16.msra.mxu0 0
        %1037 = vmatprep.subr.bf16.mxu0 0
        %1038 = vmatpush2.bf16.msra.mxu0 0
        %1039 = vmatprep.subr.bf16.mxu0 0
        %1040 = vmatpush2.bf16.msra.mxu0 0
        %1041 = vmatprep.subr.bf16.mxu0 0
        %1042 = vmatpush2.bf16.msra.mxu0 0
        %1043 = vmatprep.subr.bf16.mxu0 0
        %1044 = vmatpush2.bf16.msra.mxu0 0
        %1045 = vmatprep.subr.bf16.mxu0 0
        %1046 = vmatpush2.bf16.msra.mxu0 0
        %1047 = vmatprep.subr.bf16.mxu0 0
        %1048 = vmatpush2.bf16.msra.mxu0 0
        %1049 = vmatprep.subr.bf16.mxu0 0
        %1050 = vmatpush2.bf16.msra.mxu0 0
        %1051 = vmatprep.mubr.bf16.mxu0 0
        %1052 = vmatmul.mubr.bf16.gmra.mxu0 %v1008
        %v1053 = vpop.f32.mrf.mxu0
        %v1054 = vadd.f32 0.0, %v1053
        %v1055 = vpop.f32.mrf.mxu0
        %v1056 = vadd.f32 0.0, %v1055
        %v1057 = vpop.f32.mrf.mxu0
        %v1058 = vpop.f32.mrf.mxu0
        %1059 = vdwg.mxu0
        %1060 = vmatprep.subr.bf16.mxu0 0
        %1061 = vmatpush1.bf16.msra.mxu0 0
        %1062 = vmatprep.subr.bf16.mxu0 0
        %1063 = vmatpush1.bf16.msra.mxu0 0
        %1064 = vmatprep.subr.bf16.mxu0 0
        %1065 = vmatpush1.bf16.msra.mxu0 0
        %1066 = vmatprep.subr.bf16.mxu0 0
        %1067 = vmatpush1.bf16.msra.mxu0 0
        %1068 = vmatprep.subr.bf16.mxu0 0
        %1069 = vmatpush1.bf16.msra.mxu0 0
        %1070 = vmatprep.subr.bf16.mxu0 0
        %1071 = vmatpush1.bf16.msra.mxu0 0
        %1072 = vmatprep.subr.bf16.mxu0 0
        %1073 = vmatpush1.bf16.msra.mxu0 0
        %1074 = vmatprep.subr.bf16.mxu0 0
        %1075 = vmatpush1.bf16.msra.mxu0 %v1017
        %1076 = vmatprep.subr.bf16.mxu0 0
        %1077 = vmatpush2.bf16.msra.mxu0 0
        %1078 = vmatprep.subr.bf16.mxu0 0
        %1079 = vmatpush2.bf16.msra.mxu0 0
        %1080 = vmatprep.subr.bf16.mxu0 0
        %1081 = vmatpush2.bf16.msra.mxu0 0
        %1082 = vmatprep.subr.bf16.mxu0 0
        %1083 = vmatpush2.bf16.msra.mxu0 0
        %1084 = vmatprep.subr.bf16.mxu0 0
        %1085 = vmatpush2.bf16.msra.mxu0 0
        %1086 = vmatprep.subr.bf16.mxu0 0
        %1087 = vmatpush2.bf16.msra.mxu0 0
        %1088 = vmatprep.subr.bf16.mxu0 0
        %1089 = vmatpush2.bf16.msra.mxu0 0
        %1090 = vmatprep.subr.bf16.mxu0 0
        %1091 = vmatpush2.bf16.msra.mxu0 0
        %1092 = vmatprep.mubr.bf16.mxu0 0
        %1093 = vmatmul.mubr.bf16.gmra.mxu0 %v1008
        %v1094 = vpop.f32.mrf.mxu0
        %v1095 = vadd.f32 0.0, %v1094
        %v1096 = vpop.f32.mrf.mxu0
        %v1097 = vpop.f32.mrf.mxu0
        %v1098 = vpop.f32.mrf.mxu0
        %1099 = vdwg.mxu0
        %v1100 = vadd.f32 %v971, %v1054
        %v1101 = vadd.f32 %v972, %v1056
        %v1102 = vadd.f32 %v973, %v1095
        %v1103 = vld [vmem:[%s208] sm:$0xff]
        %s1104 = scalar_lea.vmem %s212, 28
        %v1105 = vld [vmem:[%s1104] sm:$0xf]
        %v1107 = vcombine.high %v1103, %v1103
        %v1109 = vunpack.c.l.s4 1983009808
        %v1110 = vunpack.c.0.s8 %v1109
        %v1111 = vlaneseq
        %v1112 = vshrl.u32 %v1111, 7
        %v1113 = vsub.s32 %v1110, %v1112
        %v1114 = vrot.slane %v1103, %v1113
        %v1116 = vunpack.c.l.s4 1983009808
        %v1117 = vunpack.c.0.s8 %v1116
        %v1118 = vlaneseq
        %v1119 = vshrl.u32 %v1118, 7
        %v1120 = vsub.s32 %v1117, %v1119
        %v1121 = vrot.slane %v1107, %v1120
        %v1122 = vcombine.high %v1114, %v1114
        %v1123 = vcombine.high %v1121, %v1121
        %1124 = vrot.lane.b32.xlu0 %v1114, 91
        %v1125 = vpop.permute.xlu0 %1124
        %1126 = vrot.lane.b32.xlu0 %v1122, 91
        %v1127 = vpop.permute.xlu0 %1126
        %1128 = vrot.lane.b32.xlu0 %v1121, 91
        %v1129 = vpop.permute.xlu0 %1128
        %1130 = vrot.lane.b32.xlu0 %v1123, 91
        %v1131 = vpop.permute.xlu0 %1130
        %vm1132 = vcmask 744448
        %v1133 = vsel %vm1132, %v1125, %v1127
        %v1134 = vsel %vm1132, %v1127, %v1129
        %v1135 = vsel %vm1132, %v1129, %v1131
        %v1137 = vsel %vm253, %v1105, 0
        %v1140 = vsel %vm257, %v1133, 0
        %v1143 = vsel %vm257, %v1134, 0
        %v1146 = vsel %vm257, %v1135, 0
        %1148 = vmatprep.subr.bf16.mxu0 0
        %1149 = vmatpush1.bf16.msra.mxu0 0
        %1150 = vmatprep.subr.bf16.mxu0 0
        %1151 = vmatpush1.bf16.msra.mxu0 0
        %1152 = vmatprep.subr.bf16.mxu0 0
        %1153 = vmatpush1.bf16.msra.mxu0 0
        %1154 = vmatprep.subr.bf16.mxu0 0
        %1155 = vmatpush1.bf16.msra.mxu0 0
        %1156 = vmatprep.subr.bf16.mxu0 0
        %1157 = vmatpush1.bf16.msra.mxu0 0
        %1158 = vmatprep.subr.bf16.mxu0 0
        %1159 = vmatpush1.bf16.msra.mxu0 0
        %1160 = vmatprep.subr.bf16.mxu0 0
        %1161 = vmatpush1.bf16.msra.mxu0 0
        %1162 = vmatprep.subr.bf16.mxu0 %v1143
        %1163 = vmatpush1.bf16.msra.mxu0 %v1140
        %1164 = vmatprep.subr.bf16.mxu0 0
        %1165 = vmatpush2.bf16.msra.mxu0 0
        %1166 = vmatprep.subr.bf16.mxu0 0
        %1167 = vmatpush2.bf16.msra.mxu0 0
        %1168 = vmatprep.subr.bf16.mxu0 0
        %1169 = vmatpush2.bf16.msra.mxu0 0
        %1170 = vmatprep.subr.bf16.mxu0 0
        %1171 = vmatpush2.bf16.msra.mxu0 0
        %1172 = vmatprep.subr.bf16.mxu0 0
        %1173 = vmatpush2.bf16.msra.mxu0 0
        %1174 = vmatprep.subr.bf16.mxu0 0
        %1175 = vmatpush2.bf16.msra.mxu0 0
        %1176 = vmatprep.subr.bf16.mxu0 0
        %1177 = vmatpush2.bf16.msra.mxu0 0
        %1178 = vmatprep.subr.bf16.mxu0 0
        %1179 = vmatpush2.bf16.msra.mxu0 0
        %1180 = vmatprep.mubr.bf16.mxu0 0
        %1181 = vmatmul.mubr.bf16.gmra.mxu0 %v1137
        %v1182 = vpop.f32.mrf.mxu0
        %v1183 = vadd.f32 0.0, %v1182
        %v1184 = vpop.f32.mrf.mxu0
        %v1185 = vadd.f32 0.0, %v1184
        %v1186 = vpop.f32.mrf.mxu0
        %v1187 = vpop.f32.mrf.mxu0
        %1188 = vdwg.mxu0
        %1189 = vmatprep.subr.bf16.mxu0 0
        %1190 = vmatpush1.bf16.msra.mxu0 0
        %1191 = vmatprep.subr.bf16.mxu0 0
        %1192 = vmatpush1.bf16.msra.mxu0 0
        %1193 = vmatprep.subr.bf16.mxu0 0
        %1194 = vmatpush1.bf16.msra.mxu0 0
        %1195 = vmatprep.subr.bf16.mxu0 0
        %1196 = vmatpush1.bf16.msra.mxu0 0
        %1197 = vmatprep.subr.bf16.mxu0 0
        %1198 = vmatpush1.bf16.msra.mxu0 0
        %1199 = vmatprep.subr.bf16.mxu0 0
        %1200 = vmatpush1.bf16.msra.mxu0 0
        %1201 = vmatprep.subr.bf16.mxu0 0
        %1202 = vmatpush1.bf16.msra.mxu0 0
        %1203 = vmatprep.subr.bf16.mxu0 0
        %1204 = vmatpush1.bf16.msra.mxu0 %v1146
        %1205 = vmatprep.subr.bf16.mxu0 0
        %1206 = vmatpush2.bf16.msra.mxu0 0
        %1207 = vmatprep.subr.bf16.mxu0 0
        %1208 = vmatpush2.bf16.msra.mxu0 0
        %1209 = vmatprep.subr.bf16.mxu0 0
        %1210 = vmatpush2.bf16.msra.mxu0 0
        %1211 = vmatprep.subr.bf16.mxu0 0
        %1212 = vmatpush2.bf16.msra.mxu0 0
        %1213 = vmatprep.subr.bf16.mxu0 0
        %1214 = vmatpush2.bf16.msra.mxu0 0
        %1215 = vmatprep.subr.bf16.mxu0 0
        %1216 = vmatpush2.bf16.msra.mxu0 0
        %1217 = vmatprep.subr.bf16.mxu0 0
        %1218 = vmatpush2.bf16.msra.mxu0 0
        %1219 = vmatprep.subr.bf16.mxu0 0
        %1220 = vmatpush2.bf16.msra.mxu0 0
        %1221 = vmatprep.mubr.bf16.mxu0 0
        %1222 = vmatmul.mubr.bf16.gmra.mxu0 %v1137
        %v1223 = vpop.f32.mrf.mxu0
        %v1224 = vadd.f32 0.0, %v1223
        %v1225 = vpop.f32.mrf.mxu0
        %v1226 = vpop.f32.mrf.mxu0
        %v1227 = vpop.f32.mrf.mxu0
        %1228 = vdwg.mxu0
        %v1229 = vadd.f32 %v1100, %v1183
        %v1230 = vadd.f32 %v1101, %v1185
        %v1231 = vadd.f32 %v1102, %v1224
        %v1232 = vld [vmem:[%s208] sm:$0xff]
        %s1233 = scalar_lea.vmem %s212, 32
        %v1234 = vld [vmem:[%s1233] sm:$0xf]
        %v1236 = vcombine.high %v1232, %v1232
        %v1238 = vunpack.c.l.s4 1983009808
        %v1239 = vunpack.c.0.s8 %v1238
        %v1240 = vlaneseq
        %v1241 = vshrl.u32 %v1240, 7
        %v1242 = vsub.s32 %v1239, %v1241
        %v1243 = vrot.slane %v1232, %v1242
        %v1245 = vunpack.c.l.s4 1983009808
        %v1246 = vunpack.c.0.s8 %v1245
        %v1247 = vlaneseq
        %v1248 = vshrl.u32 %v1247, 7
        %v1249 = vsub.s32 %v1246, %v1248
        %v1250 = vrot.slane %v1236, %v1249
        %v1251 = vcombine.high %v1243, %v1243
        %v1252 = vcombine.high %v1250, %v1250
        %1253 = vrot.lane.b32.xlu0 %v1243, 90
        %v1254 = vpop.permute.xlu0 %1253
        %1255 = vrot.lane.b32.xlu0 %v1251, 90
        %v1256 = vpop.permute.xlu0 %1255
        %1257 = vrot.lane.b32.xlu0 %v1250, 90
        %v1258 = vpop.permute.xlu0 %1257
        %1259 = vrot.lane.b32.xlu0 %v1252, 90
        %v1260 = vpop.permute.xlu0 %1259
        %vm1261 = vcmask 736256
        %v1262 = vsel %vm1261, %v1254, %v1256
        %v1263 = vsel %vm1261, %v1256, %v1258
        %v1264 = vsel %vm1261, %v1258, %v1260
        %v1266 = vsel %vm253, %v1234, 0
        %v1269 = vsel %vm257, %v1262, 0
        %v1272 = vsel %vm257, %v1263, 0
        %v1275 = vsel %vm257, %v1264, 0
        %1277 = vmatprep.subr.bf16.mxu0 0
        %1278 = vmatpush1.bf16.msra.mxu0 0
        %1279 = vmatprep.subr.bf16.mxu0 0
        %1280 = vmatpush1.bf16.msra.mxu0 0
        %1281 = vmatprep.subr.bf16.mxu0 0
        %1282 = vmatpush1.bf16.msra.mxu0 0
        %1283 = vmatprep.subr.bf16.mxu0 0
        %1284 = vmatpush1.bf16.msra.mxu0 0
        %1285 = vmatprep.subr.bf16.mxu0 0
        %1286 = vmatpush1.bf16.msra.mxu0 0
        %1287 = vmatprep.subr.bf16.mxu0 0
        %1288 = vmatpush1.bf16.msra.mxu0 0
        %1289 = vmatprep.subr.bf16.mxu0 0
        %1290 = vmatpush1.bf16.msra.mxu0 0
        %1291 = vmatprep.subr.bf16.mxu0 %v1272
        %1292 = vmatpush1.bf16.msra.mxu0 %v1269
        %1293 = vmatprep.subr.bf16.mxu0 0
        %1294 = vmatpush2.bf16.msra.mxu0 0
        %1295 = vmatprep.subr.bf16.mxu0 0
        %1296 = vmatpush2.bf16.msra.mxu0 0
        %1297 = vmatprep.subr.bf16.mxu0 0
        %1298 = vmatpush2.bf16.msra.mxu0 0
        %1299 = vmatprep.subr.bf16.mxu0 0
        %1300 = vmatpush2.bf16.msra.mxu0 0
        %1301 = vmatprep.subr.bf16.mxu0 0
        %1302 = vmatpush2.bf16.msra.mxu0 0
        %1303 = vmatprep.subr.bf16.mxu0 0
        %1304 = vmatpush2.bf16.msra.mxu0 0
        %1305 = vmatprep.subr.bf16.mxu0 0
        %1306 = vmatpush2.bf16.msra.mxu0 0
        %1307 = vmatprep.subr.bf16.mxu0 0
        %1308 = vmatpush2.bf16.msra.mxu0 0
        %1309 = vmatprep.mubr.bf16.mxu0 0
        %1310 = vmatmul.mubr.bf16.gmra.mxu0 %v1266
        %v1311 = vpop.f32.mrf.mxu0
        %v1312 = vadd.f32 0.0, %v1311
        %v1313 = vpop.f32.mrf.mxu0
        %v1314 = vadd.f32 0.0, %v1313
        %v1315 = vpop.f32.mrf.mxu0
        %v1316 = vpop.f32.mrf.mxu0
        %1317 = vdwg.mxu0
        %1318 = vmatprep.subr.bf16.mxu0 0
        %1319 = vmatpush1.bf16.msra.mxu0 0
        %1320 = vmatprep.subr.bf16.mxu0 0
        %1321 = vmatpush1.bf16.msra.mxu0 0
        %1322 = vmatprep.subr.bf16.mxu0 0
        %1323 = vmatpush1.bf16.msra.mxu0 0
        %1324 = vmatprep.subr.bf16.mxu0 0
        %1325 = vmatpush1.bf16.msra.mxu0 0
        %1326 = vmatprep.subr.bf16.mxu0 0
        %1327 = vmatpush1.bf16.msra.mxu0 0
        %1328 = vmatprep.subr.bf16.mxu0 0
        %1329 = vmatpush1.bf16.msra.mxu0 0
        %1330 = vmatprep.subr.bf16.mxu0 0
        %1331 = vmatpush1.bf16.msra.mxu0 0
        %1332 = vmatprep.subr.bf16.mxu0 0
        %1333 = vmatpush1.bf16.msra.mxu0 %v1275
        %1334 = vmatprep.subr.bf16.mxu0 0
        %1335 = vmatpush2.bf16.msra.mxu0 0
        %1336 = vmatprep.subr.bf16.mxu0 0
        %1337 = vmatpush2.bf16.msra.mxu0 0
        %1338 = vmatprep.subr.bf16.mxu0 0
        %1339 = vmatpush2.bf16.msra.mxu0 0
        %1340 = vmatprep.subr.bf16.mxu0 0
        %1341 = vmatpush2.bf16.msra.mxu0 0
        %1342 = vmatprep.subr.bf16.mxu0 0
        %1343 = vmatpush2.bf16.msra.mxu0 0
        %1344 = vmatprep.subr.bf16.mxu0 0
        %1345 = vmatpush2.bf16.msra.mxu0 0
        %1346 = vmatprep.subr.bf16.mxu0 0
        %1347 = vmatpush2.bf16.msra.mxu0 0
        %1348 = vmatprep.subr.bf16.mxu0 0
        %1349 = vmatpush2.bf16.msra.mxu0 0
        %1350 = vmatprep.mubr.bf16.mxu0 0
        %1351 = vmatmul.mubr.bf16.gmra.mxu0 %v1266
        %v1352 = vpop.f32.mrf.mxu0
        %v1353 = vadd.f32 0.0, %v1352
        %v1354 = vpop.f32.mrf.mxu0
        %v1355 = vpop.f32.mrf.mxu0
        %v1356 = vpop.f32.mrf.mxu0
        %1357 = vdwg.mxu0
        %v1358 = vadd.f32 %v1229, %v1312
        %v1359 = vadd.f32 %v1230, %v1314
        %v1360 = vadd.f32 %v1231, %v1353
        %v1361 = vld [vmem:[%s216] sm:$0xff]
        %1363 = vset.pattern.permute.xlu0 0
        %1364 = vperm.xlu0 %1363, %v1361
        %v1365 = vpop.permute.xlu0 %1364
        %v1367 = vadd.f32 %v1358, %v1365
        %v1368 = vadd.f32 %v1359, %v1365
        %v1369 = vadd.f32 %v1360, %v1365
        %v1370 = vxor.u32 %v1367, 2147483648
        %v1371 = vxor.u32 %v1368, 2147483648
        %v1372 = vxor.u32 %v1369, 2147483648
        %v1373 = vmul.f32 %v1370, 1.442695
        %v1374 = vpow.pop %v1373
        %v1375 = vmul.f32 %v1371, 1.442695
        %v1376 = vpow.pop %v1375
        %v1377 = vmul.f32 %v1372, 1.442695
        %v1378 = vpow.pop %v1377
        %v1379 = vadd.f32 %v1374, 1.0
        %v1380 = vadd.f32 %v1376, 1.0
        %v1381 = vadd.f32 %v1378, 1.0
        %v1382 = vrcp.pop %v1379
        %v1383 = vmul.f32 1.0, %v1382
        %v1384 = vrcp.pop %v1380
        %v1385 = vmul.f32 1.0, %v1384
        %v1386 = vrcp.pop %v1381
        %v1387 = vmul.f32 1.0, %v1386
        %v1388 = vmul.f32 %v1367, %v1383
        %v1389 = vmul.f32 %v1368, %v1385
        %v1390 = vmul.f32 %v1369, %v1387
        %v1391 = vpack.c.bf16 %v1388, %v1388
        %v1392 = vpack.c.bf16 %v1389, %v1389
        %v1393 = vpack.c.bf16 %v1390, %v1390
        %v1397 = vunpack.c.l.b16 %v1391
        %v1398 = vunpack.c.l.b16 %v1392
        %v1399 = vunpack.c.l.b16 %v1393
        %v1400 = vpack.c.b16 %v1398, %v1397
        %v1401 = vpack.c.b16 %v1399, %v1399
        %1404 = vst [vmem:[%s203] sm:$0xff] %v1400
        %1405 = vst [vmem:[%s203 + $0x8] sm:$0xf] %v1401
        %s1406 = sand.u32 %s117, 1
        %s1407 = scalar_lea.sflag [#allocation3], %s1406
        %s1408 = sand.u32 %s117, 1
        %s1409 = smul.addr %s1408, 12
        %s1410 = scalar_lea.vmem [#allocation2], %s1409
        // Predicated region
        $region33: #{tpu_custom_call.1} parent=31 // pred_check
          %p1411 = pneg %p127
        $region34: #{tpu_custom_call.1} parent=31 // pred_check_branch
          %1413 = sbr.rel (%p1411) target = $region36
        $region35: #{tpu_custom_call.1} parent=31 // pred_region
          %s1415 = ssub.s32 192, 192
          %1416 = vsyncadd %s1407, %s1415
          %s1417 = smul.addr %s22, 3
          %s1418 = smul.addr %s21, 3
          %s1419 = sadd.s32 %s1417, %s1418
          %s1420 = smul.addr %s1419, 64
          %s1421 = scalar_lea.hbm %s3, %s1420
          %s1423 = sshll.u32 %s1410, 4
          %s1424 = int_to_ptr.vmem [resolvable:$true] %s1423
          %1426 = dma.vmem_to_hbm [thread:$0]  %s1424, 192, %s1421, %s1407
        $region36: #{tpu_custom_call.1} parent=31 // pred_fallthru
          _
      $region32: #{tpu_custom_call.1} parent=5 // pred_fallthru
        _
      %p1427 = scmp.le.s32.totalorder 2, %s12
      // Predicated region
      $region37: #{tpu_custom_call.1} parent=5 // pred_check
        %p1428 = pneg %p1427
      $region38: #{tpu_custom_call.1} parent=5 // pred_check_branch
        %1430 = sbr.rel (%p1428) target = $region40
      $region39: #{tpu_custom_call.1} parent=5 // pred_region
        %s1431 = ssub.s32 %s12, 2
        // Predicated region
        $region41: #{tpu_custom_call.1} parent=39 // pred_check
          %p1432 = pneg %p133
        $region42: #{tpu_custom_call.1} parent=39 // pred_check_branch
          %1434 = sbr.rel (%p1432) target = $region44
        $region43: #{tpu_custom_call.1} parent=39 // pred_region
          %s1435 = sand.u32 %s118, 1
          %s1436 = scalar_lea.sflag [#allocation3], %s1435
          %s1437 = sand.u32 %s118, 1
          %s1438 = smul.addr %s1437, 12
          %s1439 = scalar_lea.vmem [#allocation2], %s1438
          %1440 = dma.done %s1436, 192
        $region44: #{tpu_custom_call.1} parent=39 // pred_fallthru
          _
      $region40: #{tpu_custom_call.1} parent=5 // pred_fallthru
        _
    $region6: #{tpu_custom_call.1} parent=1 // loop_footer
      %s16 = sadd.s32 1, %s12
    $region7: #{tpu_custom_call.1} parent=1 // loop_footer_branch
      %11 = sbr.rel target = $region3
    $region8: #{tpu_custom_call.1} parent=1 // loop_exit
      _
    %1441 = vsyncpa [#allocation3], 1
    %s1442 = scalar_lea.sflag [#allocation3], 1
    %1443 = vsyncpa %s1442, 1

</llo_original>
